<compile_context>
chip_gen: v6e
topology: v6e:2x2x1
jax: 0.10.0
libtpu: 0.0.40
codegen_flags: <defaults>
</compile_context>

<pallas_src>
import math
import numpy as np

import jax
import jax.numpy as jnp
from jax import lax
from jax.experimental import pallas as pl
from jax.experimental.pallas import tpu as pltpu

# ----------------------------- small config -----------------------------
B, S = 2, 8                 # batch, seq
HIDDEN = 32                 # hidden_size
NUM_HEADS = 4               # num_attention_heads
HEAD_DIM = 8                # head_dim
NUM_KV_HEADS = 2            # num_key_value_heads
GROUPS = NUM_HEADS // NUM_KV_HEADS
LOW_RANK = 4                # config.AE['low_rank']
ROPE_THETA = 10000.0
DTYPE = jnp.float32

HALF = HEAD_DIM // 2

# nope_mask: per kv head, first half of head_dim uses RoPE (False),
# second half is NoPE (True).  Deterministic stand-in for IndexForNope.
_nope_mask = np.zeros((NUM_KV_HEADS * HEAD_DIM,), dtype=bool)
for h in range(NUM_KV_HEADS):
    _nope_mask[h * HEAD_DIM + HALF:(h + 1) * HEAD_DIM] = True
NOPE_IDX = np.where(_nope_mask)[0]
ROPE_IDX = np.where(~_nope_mask)[0]
NOPE_SUM = int(_nope_mask.sum())          # k_proj / W_up_k output size (8)
ROPE_SUM = int((~_nope_mask).sum())       # W_k_r output size (8)
NOPE_PER_HEAD = NOPE_SUM // NUM_KV_HEADS  # 4
ROPE_PER_HEAD = ROPE_SUM // NUM_KV_HEADS  # 4

QD = NUM_HEADS * HEAD_DIM                 # 32
LR = LOW_RANK * NUM_KV_HEADS              # 8
C_DIM = 2 * LR                            # 16  (c_k | c_v)
UP_OUT = NOPE_SUM + NUM_KV_HEADS * HEAD_DIM   # 24  (k_c | value)
BIG_N = 2 * QD + ROPE_SUM + C_DIM         # 88  (q | q_rot | k_r | c_pre)
W_SLAB_N = BIG_N + UP_OUT + HIDDEN        # 144
T_SLAB_N = 2 * QD + ROPE_SUM              # 72  (cos_q | sin_q | cos_k)


# ----------------------------- Pallas kernel -----------------------------
def _fused_attn_kernel(x_ref, w_ref, t_ref, o_ref):
    # single grid step: everything (activations + weights + tables) VMEM resident
    x = x_ref[...].reshape(B * S, HIDDEN)          # (16, 32) — all batches at once
    w = w_ref[...]                                  # (32, 144) packed weight slab
    t = t_ref[...]                                  # (16, 72)  packed rope tables

    # --- one wide MXU pass: q | rotate_half(q) | k_r | c_pre (k/v/down folded) ---
    big = jnp.dot(x, w[:, :BIG_N], preferred_element_type=jnp.float32)   # (16, 88)
    q_all = big[:, :QD]
    q_rot = big[:, QD:2 * QD]
    k_r = big[:, 2 * QD:2 * QD + ROPE_SUM]
    c_pre = big[:, 2 * QD + ROPE_SUM:]              # (16, 16)

    cos_q = t[:, :QD]
    sin_q = t[:, QD:2 * QD]
    cos_k = t[:, 2 * QD:]

    # --- RoPE: pure VPU elementwise (rotate_half + 1/sqrt(D) pre-baked) ---
    q_rope = q_all * cos_q + q_rot * sin_q          # (16, 32), already scaled
    # keys keep only the cos-scaled rope half; the sin-rotated half is discarded
    # by the module (it is overwritten by k_c), so this is exact.
    k_rope = k_r * cos_k                            # (16, 8)

    # --- AutoEncoderV1: SiLU(c_pre) then block-diagonal up projection ---
    c = c_pre * jax.nn.sigmoid(c_pre)               # SiLU
    up = jnp.dot(c, w[:C_DIM, BIG_N:BIG_N + UP_OUT],
                 preferred_element_type=jnp.float32)             # (16, 24)
    k_c = up[:, :NOPE_SUM]                          # (16, 8)
    v_states = up[:, NOPE_SUM:]                     # (16, 16)

    # --- attention: per (batch, kv group); q heads of a group stacked on sublanes ---
    dn_qk = (((1,), (1,)), ((), ()))                # q @ k.T without transpose
    attn_rows = []
    for b in range(B):
        r0, r1 = b * S, (b + 1) * S
        head_out = [None] * NUM_HEADS
        for g in range(NUM_KV_HEADS):
            k_h = jnp.concatenate(
                [k_rope[r0:r1, g * ROPE_PER_HEAD:(g + 1) * ROPE_PER_HEAD],
                 k_c[r0:r1, g * NOPE_PER_HEAD:(g + 1) * NOPE_PER_HEAD]],
                axis=-1)                                          # (S, D)
            v_h = v_states[r0:r1, g * HEAD_DIM:(g + 1) * HEAD_DIM]  # (S, D)
            q_stack = jnp.concatenate(
                [q_rope[r0:r1, h * HEAD_DIM:(h + 1) * HEAD_DIM]
                 for h in range(g * GROUPS, (g + 1) * GROUPS)],
                axis=0)                                           # (GROUPS*S, D)
            s_ = lax.dot_general(q_stack, k_h, dn_qk,
                                 preferred_element_type=jnp.float32)  # (GROUPS*S, S)
            # softmax in f32 (attention_mask=None, dropout=identity in eval)
            s_ = s_ - jnp.max(s_, axis=-1, keepdims=True)
            p = jnp.exp(s_)
            inv = pl.reciprocal(jnp.sum(p, axis=-1, keepdims=True), approx=True)
            p = p * inv
            o_g = jnp.dot(p, v_h, preferred_element_type=jnp.float32)  # (GROUPS*S, D)
            for j in range(GROUPS):
                head_out[g * GROUPS + j] = o_g[j * S:(j + 1) * S, :]
        attn_rows.append(jnp.concatenate(head_out, axis=-1))      # (S, H*D)
    attn = jnp.concatenate(attn_rows, axis=0)                     # (16, 32)

    out = jnp.dot(attn, w[:, BIG_N + UP_OUT:],
                  preferred_element_type=jnp.float32)             # (16, HIDDEN)
    for b in range(B):
        o_ref[b, :, :] = out[b * S:(b + 1) * S, :].astype(o_ref.dtype)


def fused_forward(hidden_states, w_slab, tables):
    bsz, q_len, _ = hidden_states.shape
    return pl.pallas_call(
        _fused_attn_kernel,
        out_shape=jax.ShapeDtypeStruct((bsz, q_len, HIDDEN), hidden_states.dtype),
        grid=(1,),   # single step: fixed per-step overhead paid exactly once
        in_specs=[
            pl.BlockSpec((bsz, q_len, HIDDEN), lambda i: (0, 0, 0)),
            pl.BlockSpec((HIDDEN, W_SLAB_N), lambda i: (0, 0)),
            pl.BlockSpec((bsz * q_len, T_SLAB_N), lambda i: (0, 0)),
        ],
        out_specs=pl.BlockSpec((bsz, q_len, HIDDEN), lambda i: (0, 0, 0)),
        compiler_params=pltpu.CompilerParams(
            dimension_semantics=("arbitrary",)),
    )(hidden_states, w_slab, tables)


# ----------------------------- host-side packing -----------------------------
def rotary_cos_sin_1d(positions):
    inv_freq = 1.0 / (
        ROPE_THETA ** (jnp.arange(0, HEAD_DIM, 2, dtype=jnp.float32) / HEAD_DIM))
    freqs = positions.astype(jnp.float32)[:, None] * inv_freq[None, :]
    emb = jnp.concatenate([freqs, freqs], axis=-1)
    return jnp.cos(emb).astype(DTYPE), jnp.sin(emb).astype(DTYPE)


def init_params(key):
    def w(key, shape, scale=0.05):
        return (scale * jax.random.normal(key, shape, dtype=jnp.float32)).astype(DTYPE)

    ks = jax.random.split(key, 9)
    return {
        # nn.Linear weights are (out_features, in_features), bias=False
        "q_proj": w(ks[0], (NUM_HEADS * HEAD_DIM, HIDDEN)),
        "k_proj": w(ks[1], (NOPE_SUM, HIDDEN)),
        "v_proj": w(ks[2], (NUM_KV_HEADS * HEAD_DIM, HIDDEN)),
        "W_k_r": w(ks[3], (ROPE_SUM, HIDDEN)),
        "o_proj": w(ks[4], (HIDDEN, NUM_HEADS * HEAD_DIM)),
        # AutoEncoderV1
        "W_down_k": w(ks[5], (LOW_RANK * NUM_KV_HEADS, NOPE_SUM)),
        "W_down_v": w(ks[6], (LOW_RANK * NUM_KV_HEADS, NUM_KV_HEADS * HEAD_DIM)),
        "W_up_k": w(ks[7], (NOPE_SUM, LOW_RANK * NUM_KV_HEADS)),
        "W_up_v": w(ks[8], (NUM_KV_HEADS * HEAD_DIM, LOW_RANK * NUM_KV_HEADS)),
    }


def pack_weight_slab(params):
    """Pre-transpose / permute / compose weights ONCE into a single 2-D slab."""
    scale = 1.0 / math.sqrt(HEAD_DIM)
    wq = params["q_proj"].T * scale                               # (HIDDEN, QD)
    # rotate_half baked into a second copy of the q weights (col perm + negation)
    wq_rot_heads = []
    for h in range(NUM_HEADS):
        wh = wq[:, h * HEAD_DIM:(h + 1) * HEAD_DIM]
        wq_rot_heads.append(jnp.concatenate([-wh[:, HALF:], wh[:, :HALF]], axis=1))
    wq_rot = jnp.concatenate(wq_rot_heads, axis=1)                # (HIDDEN, QD)

    # k_proj / v_proj composed with the AE down weights (exact by associativity):
    # c_pre = x @ [k_proj.T @ W_down_k.T | v_proj.T @ W_down_v.T]
    w_c = jnp.concatenate(
        [params["k_proj"].T @ params["W_down_k"].T,
         params["v_proj"].T @ params["W_down_v"].T], axis=1)      # (HIDDEN, C_DIM)

    w_big = jnp.concatenate([wq, wq_rot, params["W_k_r"].T, w_c], axis=1)  # (32, 88)

    # block-diagonal up projection (k | v), zero-padded to HIDDEN rows
    w_up = jnp.zeros((C_DIM, UP_OUT), DTYPE)
    w_up = w_up.at[:LR, :NOPE_SUM].set(params["W_up_k"].T)
    w_up = w_up.at[LR:, NOPE_SUM:].set(params["W_up_v"].T)
    w_up_pad = jnp.zeros((HIDDEN, UP_OUT), DTYPE).at[:C_DIM, :].set(w_up)

    return jnp.concatenate([w_big, w_up_pad, params["o_proj"].T], axis=1)  # (32, 144)


def pack_rope_tables(q_len, bsz):
    """Head-tiled cos/sin tables, tiled over batch (positions = arange per batch)."""
    cos1, sin1 = rotary_cos_sin_1d(jnp.arange(q_len))             # (S, HEAD_DIM)
    cos_q = jnp.tile(cos1, (1, NUM_HEADS))                        # (S, QD)
    sin_q = jnp.tile(sin1, (1, NUM_HEADS))                        # (S, QD)
    cos_k = jnp.tile(cos1[:, :ROPE_PER_HEAD], (1, NUM_KV_HEADS))  # (S, ROPE_SUM)
    t = jnp.concatenate([cos_q, sin_q, cos_k], axis=-1)           # (S, 72)
    return jnp.tile(t, (bsz, 1))                                  # (B*S, 72)


# ----------------------------- pure-JAX reference -----------------------------
def reference_forward(hidden_states, params):
    """Faithful pure-JAX port of CustomLlamaAttention (AE v1, no cache/mask)."""
    lin = lambda x, w: x @ w.T
    bsz, q_len, _ = hidden_states.shape

    query_states = lin(hidden_states, params["q_proj"])
    k_r = lin(hidden_states, params["W_k_r"])
    key_states = jnp.zeros((bsz, q_len, NUM_KV_HEADS * HEAD_DIM), DTYPE)
    key_states = key_states.at[..., ROPE_IDX].set(k_r)

    q = query_states.reshape(bsz, q_len, NUM_HEADS, HEAD_DIM).transpose(0, 2, 1, 3)
    k = key_states.reshape(bsz, q_len, NUM_KV_HEADS, HEAD_DIM).transpose(0, 2, 1, 3)

    cos1, sin1 = rotary_cos_sin_1d(jnp.arange(q_len))
    cos = jnp.broadcast_to(cos1[None], (bsz, q_len, HEAD_DIM))[:, None]
    sin = jnp.broadcast_to(sin1[None], (bsz, q_len, HEAD_DIM))[:, None]

    def rot_half(t):
        return jnp.concatenate([-t[..., HALF:], t[..., :HALF]], axis=-1)

    q = q * cos + rot_half(q) * sin
    k = k * cos + rot_half(k) * sin

    key_states = k.transpose(0, 2, 1, 3).reshape(bsz, q_len, -1)
    k_r = key_states[..., ROPE_IDX]
    k_nope = lin(hidden_states, params["k_proj"])
    v_in = lin(hidden_states, params["v_proj"])

    c_k = jax.nn.silu(lin(k_nope, params["W_down_k"]))
    c_v = jax.nn.silu(lin(v_in, params["W_down_v"]))
    k_c = lin(c_k, params["W_up_k"])
    value_states = lin(c_v, params["W_up_v"])

    key_states = jnp.zeros((bsz, q_len, NUM_KV_HEADS * HEAD_DIM), DTYPE)
    key_states = key_states.at[..., NOPE_IDX].set(k_c)
    key_states = key_states.at[..., ROPE_IDX].set(k_r)

    k = key_states.reshape(bsz, q_len, NUM_KV_HEADS, HEAD_DIM).transpose(0, 2, 1, 3)
    v = value_states.reshape(bsz, q_len, NUM_KV_HEADS, HEAD_DIM).transpose(0, 2, 1, 3)
    k = jnp.repeat(k, GROUPS, axis=1)      # repeat_kv
    v = jnp.repeat(v, GROUPS, axis=1)

    s = jnp.einsum("bhqd,bhkd->bhqk", q, k) / math.sqrt(HEAD_DIM)
    p = jax.nn.softmax(s.astype(jnp.float32), axis=-1).astype(q.dtype)
    attn_out = jnp.einsum("bhqk,bhkd->bhqd", p, v)
    attn_out = attn_out.transpose(0, 2, 1, 3).reshape(bsz, q_len, -1)
    return lin(attn_out, params["o_proj"])


# ----------------------------- main -----------------------------
if __name__ == "__main__":
    key = jax.random.PRNGKey(0)
    pkey, xkey = jax.random.split(key)
    params = init_params(pkey)
    w_slab = pack_weight_slab(params)            # (32, 144)
    tables = pack_rope_tables(S, B)              # (16, 72)
    hidden_states = jax.random.normal(xkey, (B, S, HIDDEN), dtype=DTYPE)

    fwd = jax.jit(fused_forward)
    out = jax.block_until_ready(fwd(hidden_states, w_slab, tables))

    # correctness check against a faithful pure-JAX reference of the module
    # (tolerance loosened vs. 1e-4/1e-5 because of pl.reciprocal(approx=True))
    ref = jax.block_until_ready(reference_forward(hidden_states, params))
    np.testing.assert_allclose(np.asarray(out), np.asarray(ref),
                               rtol=1e-2, atol=1e-5)

    assert out.shape == (B, S, HIDDEN)
    print("KERNEL_OK")
</pallas_src>

<mosaic_0001>
module attributes {stable_mosaic.version = 11 : i64} {
  func.func @_fused_attn_kernel(%arg0: i32, %arg1: memref<2x8x32xf32, #tpu.memory_space<vmem>>, %arg2: memref<32x144xf32, #tpu.memory_space<vmem>>, %arg3: memref<16x72xf32, #tpu.memory_space<vmem>>, %arg4: memref<2x8x32xf32, #tpu.memory_space<vmem>>) attributes {dimension_semantics = [#tpu.dimension_semantics<arbitrary>], iteration_bounds = array<i64: 1>, scalar_prefetch = 0 : i64, scratch_operands = 0 : i64, tpu.core_type = #tpu.core_type<tc>, window_params = [{pipeline_mode = #tpu.pipeline_mode<synchronous>, transform_indices = @transform_0, window_bounds = array<i64: 2, 8, 32>}, {pipeline_mode = #tpu.pipeline_mode<synchronous>, transform_indices = @transform_1, window_bounds = array<i64: 32, 144>}, {pipeline_mode = #tpu.pipeline_mode<synchronous>, transform_indices = @transform_2, window_bounds = array<i64: 16, 72>}, {pipeline_mode = #tpu.pipeline_mode<synchronous>, transform_indices = @transform_3, window_bounds = array<i64: 2, 8, 32>}]} {
    %c0 = arith.constant 0 : index
    %c0_0 = arith.constant 0 : index
    %c0_1 = arith.constant 0 : index
    %0 = vector.load %arg1[%c0, %c0_0, %c0_1] : memref<2x8x32xf32, #tpu.memory_space<vmem>>, vector<2x8x32xf32>
    %1 = vector.shape_cast %0 : vector<2x8x32xf32> to vector<16x32xf32>
    %c0_2 = arith.constant 0 : index
    %c0_3 = arith.constant 0 : index
    %2 = vector.load %arg2[%c0_2, %c0_3] : memref<32x144xf32, #tpu.memory_space<vmem>>, vector<32x144xf32>
    %c0_4 = arith.constant 0 : index
    %c0_5 = arith.constant 0 : index
    %3 = vector.load %arg3[%c0_4, %c0_5] : memref<16x72xf32, #tpu.memory_space<vmem>>, vector<16x72xf32>
    %4 = vector.extract_strided_slice %2 {offsets = [0, 0], sizes = [32, 88], strides = [1, 1]} : vector<32x144xf32> to vector<32x88xf32>
    %cst = arith.constant dense<0.000000e+00> : vector<16x88xf32>
    %5 = tpu.matmul %1, %4, %cst {dimension_numbers = #tpu.dot_dimension_numbers<[1], [0], [0], [1], [0, 0, 1, 1], [], []>} : vector<16x32xf32>, vector<32x88xf32>, vector<16x88xf32> -> vector<16x88xf32>
    %6 = vector.extract_strided_slice %5 {offsets = [0, 0], sizes = [16, 32], strides = [1, 1]} : vector<16x88xf32> to vector<16x32xf32>
    %7 = vector.extract_strided_slice %5 {offsets = [0, 32], sizes = [16, 32], strides = [1, 1]} : vector<16x88xf32> to vector<16x32xf32>
    %8 = vector.extract_strided_slice %5 {offsets = [0, 64], sizes = [16, 8], strides = [1, 1]} : vector<16x88xf32> to vector<16x8xf32>
    %9 = vector.extract_strided_slice %5 {offsets = [0, 72], sizes = [16, 16], strides = [1, 1]} : vector<16x88xf32> to vector<16x16xf32>
    %10 = vector.extract_strided_slice %3 {offsets = [0, 0], sizes = [16, 32], strides = [1, 1]} : vector<16x72xf32> to vector<16x32xf32>
    %11 = vector.extract_strided_slice %3 {offsets = [0, 32], sizes = [16, 32], strides = [1, 1]} : vector<16x72xf32> to vector<16x32xf32>
    %12 = vector.extract_strided_slice %3 {offsets = [0, 64], sizes = [16, 8], strides = [1, 1]} : vector<16x72xf32> to vector<16x8xf32>
    %13 = arith.mulf %6, %10 : vector<16x32xf32>
    %14 = arith.mulf %7, %11 : vector<16x32xf32>
    %15 = arith.addf %13, %14 : vector<16x32xf32>
    %16 = arith.mulf %8, %12 : vector<16x8xf32>
    %17 = arith.negf %9 : vector<16x16xf32>
    %18 = math.exp %17 : vector<16x16xf32>
    %cst_6 = arith.constant 1.000000e+00 : f32
    %19 = vector.broadcast %cst_6 : f32 to vector<16x16xf32>
    %20 = arith.addf %19, %18 : vector<16x16xf32>
    %21 = arith.divf %19, %20 : vector<16x16xf32>
    %22 = arith.mulf %9, %21 : vector<16x16xf32>
    %23 = vector.extract_strided_slice %2 {offsets = [0, 88], sizes = [16, 24], strides = [1, 1]} : vector<32x144xf32> to vector<16x24xf32>
    %cst_7 = arith.constant dense<0.000000e+00> : vector<16x24xf32>
    %24 = tpu.matmul %22, %23, %cst_7 {dimension_numbers = #tpu.dot_dimension_numbers<[1], [0], [0], [1], [0, 0, 1, 1], [], []>} : vector<16x16xf32>, vector<16x24xf32>, vector<16x24xf32> -> vector<16x24xf32>
    %25 = vector.extract_strided_slice %24 {offsets = [0, 0], sizes = [16, 8], strides = [1, 1]} : vector<16x24xf32> to vector<16x8xf32>
    %26 = vector.extract_strided_slice %24 {offsets = [0, 8], sizes = [16, 16], strides = [1, 1]} : vector<16x24xf32> to vector<16x16xf32>
    %27 = vector.extract_strided_slice %16 {offsets = [0, 0], sizes = [8, 4], strides = [1, 1]} : vector<16x8xf32> to vector<8x4xf32>
    %28 = vector.extract_strided_slice %25 {offsets = [0, 0], sizes = [8, 4], strides = [1, 1]} : vector<16x8xf32> to vector<8x4xf32>
    %29 = tpu.concatenate %27, %28 in 1 : vector<8x4xf32>, vector<8x4xf32> -> vector<8x8xf32>
    %30 = vector.extract_strided_slice %26 {offsets = [0, 0], sizes = [8, 8], strides = [1, 1]} : vector<16x16xf32> to vector<8x8xf32>
    %31 = vector.extract_strided_slice %15 {offsets = [0, 0], sizes = [8, 8], strides = [1, 1]} : vector<16x32xf32> to vector<8x8xf32>
    %32 = vector.extract_strided_slice %15 {offsets = [0, 8], sizes = [8, 8], strides = [1, 1]} : vector<16x32xf32> to vector<8x8xf32>
    %33 = tpu.concatenate %31, %32 in 0 : vector<8x8xf32>, vector<8x8xf32> -> vector<16x8xf32>
    %cst_8 = arith.constant dense<0.000000e+00> : vector<16x8xf32>
    %34 = tpu.matmul %33, %29, %cst_8 {dimension_numbers = #tpu.dot_dimension_numbers<[1], [1], [0], [0], [0, 0, 1, 0], [], []>} : vector<16x8xf32>, vector<8x8xf32>, vector<16x8xf32> -> vector<16x8xf32>
    %cst_9 = arith.constant dense<0xFF800000> : vector<16xf32>
    %35 = vector.multi_reduction <maximumf>, %34, %cst_9 [1] : vector<16x8xf32> to vector<16xf32>
    %36 = vector.shape_cast %35 : vector<16xf32> to vector<16x1xf32>
    %37 = vector.broadcast %36 : vector<16x1xf32> to vector<16x8xf32>
    %38 = arith.subf %34, %37 : vector<16x8xf32>
    %39 = math.exp %38 : vector<16x8xf32>
    %cst_10 = arith.constant dense<0.000000e+00> : vector<16xf32>
    %40 = vector.multi_reduction <add>, %39, %cst_10 [1] : vector<16x8xf32> to vector<16xf32>
    %41 = vector.shape_cast %40 : vector<16xf32> to vector<16x1xf32>
    %42 = tpu.reciprocal %41 {approx = true} : vector<16x1xf32> -> vector<16x1xf32>
    %43 = vector.broadcast %42 : vector<16x1xf32> to vector<16x8xf32>
    %44 = arith.mulf %39, %43 : vector<16x8xf32>
    %cst_11 = arith.constant dense<0.000000e+00> : vector<16x8xf32>
    %45 = tpu.matmul %44, %30, %cst_11 {dimension_numbers = #tpu.dot_dimension_numbers<[1], [0], [0], [1], [0, 0, 1, 1], [], []>} : vector<16x8xf32>, vector<8x8xf32>, vector<16x8xf32> -> vector<16x8xf32>
    %46 = vector.extract_strided_slice %45 {offsets = [0, 0], sizes = [8, 8], strides = [1, 1]} : vector<16x8xf32> to vector<8x8xf32>
    %47 = vector.extract_strided_slice %45 {offsets = [8, 0], sizes = [8, 8], strides = [1, 1]} : vector<16x8xf32> to vector<8x8xf32>
    %48 = vector.extract_strided_slice %16 {offsets = [0, 4], sizes = [8, 4], strides = [1, 1]} : vector<16x8xf32> to vector<8x4xf32>
    %49 = vector.extract_strided_slice %25 {offsets = [0, 4], sizes = [8, 4], strides = [1, 1]} : vector<16x8xf32> to vector<8x4xf32>
    %50 = tpu.concatenate %48, %49 in 1 : vector<8x4xf32>, vector<8x4xf32> -> vector<8x8xf32>
    %51 = vector.extract_strided_slice %26 {offsets = [0, 8], sizes = [8, 8], strides = [1, 1]} : vector<16x16xf32> to vector<8x8xf32>
    %52 = vector.extract_strided_slice %15 {offsets = [0, 16], sizes = [8, 8], strides = [1, 1]} : vector<16x32xf32> to vector<8x8xf32>
    %53 = vector.extract_strided_slice %15 {offsets = [0, 24], sizes = [8, 8], strides = [1, 1]} : vector<16x32xf32> to vector<8x8xf32>
    %54 = tpu.concatenate %52, %53 in 0 : vector<8x8xf32>, vector<8x8xf32> -> vector<16x8xf32>
    %cst_12 = arith.constant dense<0.000000e+00> : vector<16x8xf32>
    %55 = tpu.matmul %54, %50, %cst_12 {dimension_numbers = #tpu.dot_dimension_numbers<[1], [1], [0], [0], [0, 0, 1, 0], [], []>} : vector<16x8xf32>, vector<8x8xf32>, vector<16x8xf32> -> vector<16x8xf32>
    %cst_13 = arith.constant dense<0xFF800000> : vector<16xf32>
    %56 = vector.multi_reduction <maximumf>, %55, %cst_13 [1] : vector<16x8xf32> to vector<16xf32>
    %57 = vector.shape_cast %56 : vector<16xf32> to vector<16x1xf32>
    %58 = vector.broadcast %57 : vector<16x1xf32> to vector<16x8xf32>
    %59 = arith.subf %55, %58 : vector<16x8xf32>
    %60 = math.exp %59 : vector<16x8xf32>
    %cst_14 = arith.constant dense<0.000000e+00> : vector<16xf32>
    %61 = vector.multi_reduction <add>, %60, %cst_14 [1] : vector<16x8xf32> to vector<16xf32>
    %62 = vector.shape_cast %61 : vector<16xf32> to vector<16x1xf32>
    %63 = tpu.reciprocal %62 {approx = true} : vector<16x1xf32> -> vector<16x1xf32>
    %64 = vector.broadcast %63 : vector<16x1xf32> to vector<16x8xf32>
    %65 = arith.mulf %60, %64 : vector<16x8xf32>
    %cst_15 = arith.constant dense<0.000000e+00> : vector<16x8xf32>
    %66 = tpu.matmul %65, %51, %cst_15 {dimension_numbers = #tpu.dot_dimension_numbers<[1], [0], [0], [1], [0, 0, 1, 1], [], []>} : vector<16x8xf32>, vector<8x8xf32>, vector<16x8xf32> -> vector<16x8xf32>
    %67 = vector.extract_strided_slice %66 {offsets = [0, 0], sizes = [8, 8], strides = [1, 1]} : vector<16x8xf32> to vector<8x8xf32>
    %68 = vector.extract_strided_slice %66 {offsets = [8, 0], sizes = [8, 8], strides = [1, 1]} : vector<16x8xf32> to vector<8x8xf32>
    %69 = tpu.concatenate %46, %47, %67, %68 in 1 : vector<8x8xf32>, vector<8x8xf32>, vector<8x8xf32>, vector<8x8xf32> -> vector<8x32xf32>
    %70 = vector.extract_strided_slice %16 {offsets = [8, 0], sizes = [8, 4], strides = [1, 1]} : vector<16x8xf32> to vector<8x4xf32>
    %71 = vector.extract_strided_slice %25 {offsets = [8, 0], sizes = [8, 4], strides = [1, 1]} : vector<16x8xf32> to vector<8x4xf32>
    %72 = tpu.concatenate %70, %71 in 1 : vector<8x4xf32>, vector<8x4xf32> -> vector<8x8xf32>
    %73 = vector.extract_strided_slice %26 {offsets = [8, 0], sizes = [8, 8], strides = [1, 1]} : vector<16x16xf32> to vector<8x8xf32>
    %74 = vector.extract_strided_slice %15 {offsets = [8, 0], sizes = [8, 8], strides = [1, 1]} : vector<16x32xf32> to vector<8x8xf32>
    %75 = vector.extract_strided_slice %15 {offsets = [8, 8], sizes = [8, 8], strides = [1, 1]} : vector<16x32xf32> to vector<8x8xf32>
    %76 = tpu.concatenate %74, %75 in 0 : vector<8x8xf32>, vector<8x8xf32> -> vector<16x8xf32>
    %cst_16 = arith.constant dense<0.000000e+00> : vector<16x8xf32>
    %77 = tpu.matmul %76, %72, %cst_16 {dimension_numbers = #tpu.dot_dimension_numbers<[1], [1], [0], [0], [0, 0, 1, 0], [], []>} : vector<16x8xf32>, vector<8x8xf32>, vector<16x8xf32> -> vector<16x8xf32>
    %cst_17 = arith.constant dense<0xFF800000> : vector<16xf32>
    %78 = vector.multi_reduction <maximumf>, %77, %cst_17 [1] : vector<16x8xf32> to vector<16xf32>
    %79 = vector.shape_cast %78 : vector<16xf32> to vector<16x1xf32>
    %80 = vector.broadcast %79 : vector<16x1xf32> to vector<16x8xf32>
    %81 = arith.subf %77, %80 : vector<16x8xf32>
    %82 = math.exp %81 : vector<16x8xf32>
    %cst_18 = arith.constant dense<0.000000e+00> : vector<16xf32>
    %83 = vector.multi_reduction <add>, %82, %cst_18 [1] : vector<16x8xf32> to vector<16xf32>
    %84 = vector.shape_cast %83 : vector<16xf32> to vector<16x1xf32>
    %85 = tpu.reciprocal %84 {approx = true} : vector<16x1xf32> -> vector<16x1xf32>
    %86 = vector.broadcast %85 : vector<16x1xf32> to vector<16x8xf32>
    %87 = arith.mulf %82, %86 : vector<16x8xf32>
    %cst_19 = arith.constant dense<0.000000e+00> : vector<16x8xf32>
    %88 = tpu.matmul %87, %73, %cst_19 {dimension_numbers = #tpu.dot_dimension_numbers<[1], [0], [0], [1], [0, 0, 1, 1], [], []>} : vector<16x8xf32>, vector<8x8xf32>, vector<16x8xf32> -> vector<16x8xf32>
    %89 = vector.extract_strided_slice %88 {offsets = [0, 0], sizes = [8, 8], strides = [1, 1]} : vector<16x8xf32> to vector<8x8xf32>
    %90 = vector.extract_strided_slice %88 {offsets = [8, 0], sizes = [8, 8], strides = [1, 1]} : vector<16x8xf32> to vector<8x8xf32>
    %91 = vector.extract_strided_slice %16 {offsets = [8, 4], sizes = [8, 4], strides = [1, 1]} : vector<16x8xf32> to vector<8x4xf32>
    %92 = vector.extract_strided_slice %25 {offsets = [8, 4], sizes = [8, 4], strides = [1, 1]} : vector<16x8xf32> to vector<8x4xf32>
    %93 = tpu.concatenate %91, %92 in 1 : vector<8x4xf32>, vector<8x4xf32> -> vector<8x8xf32>
    %94 = vector.extract_strided_slice %26 {offsets = [8, 8], sizes = [8, 8], strides = [1, 1]} : vector<16x16xf32> to vector<8x8xf32>
    %95 = vector.extract_strided_slice %15 {offsets = [8, 16], sizes = [8, 8], strides = [1, 1]} : vector<16x32xf32> to vector<8x8xf32>
    %96 = vector.extract_strided_slice %15 {offsets = [8, 24], sizes = [8, 8], strides = [1, 1]} : vector<16x32xf32> to vector<8x8xf32>
    %97 = tpu.concatenate %95, %96 in 0 : vector<8x8xf32>, vector<8x8xf32> -> vector<16x8xf32>
    %cst_20 = arith.constant dense<0.000000e+00> : vector<16x8xf32>
    %98 = tpu.matmul %97, %93, %cst_20 {dimension_numbers = #tpu.dot_dimension_numbers<[1], [1], [0], [0], [0, 0, 1, 0], [], []>} : vector<16x8xf32>, vector<8x8xf32>, vector<16x8xf32> -> vector<16x8xf32>
    %cst_21 = arith.constant dense<0xFF800000> : vector<16xf32>
    %99 = vector.multi_reduction <maximumf>, %98, %cst_21 [1] : vector<16x8xf32> to vector<16xf32>
    %100 = vector.shape_cast %99 : vector<16xf32> to vector<16x1xf32>
    %101 = vector.broadcast %100 : vector<16x1xf32> to vector<16x8xf32>
    %102 = arith.subf %98, %101 : vector<16x8xf32>
    %103 = math.exp %102 : vector<16x8xf32>
    %cst_22 = arith.constant dense<0.000000e+00> : vector<16xf32>
    %104 = vector.multi_reduction <add>, %103, %cst_22 [1] : vector<16x8xf32> to vector<16xf32>
    %105 = vector.shape_cast %104 : vector<16xf32> to vector<16x1xf32>
    %106 = tpu.reciprocal %105 {approx = true} : vector<16x1xf32> -> vector<16x1xf32>
    %107 = vector.broadcast %106 : vector<16x1xf32> to vector<16x8xf32>
    %108 = arith.mulf %103, %107 : vector<16x8xf32>
    %cst_23 = arith.constant dense<0.000000e+00> : vector<16x8xf32>
    %109 = tpu.matmul %108, %94, %cst_23 {dimension_numbers = #tpu.dot_dimension_numbers<[1], [0], [0], [1], [0, 0, 1, 1], [], []>} : vector<16x8xf32>, vector<8x8xf32>, vector<16x8xf32> -> vector<16x8xf32>
    %110 = vector.extract_strided_slice %109 {offsets = [0, 0], sizes = [8, 8], strides = [1, 1]} : vector<16x8xf32> to vector<8x8xf32>
    %111 = vector.extract_strided_slice %109 {offsets = [8, 0], sizes = [8, 8], strides = [1, 1]} : vector<16x8xf32> to vector<8x8xf32>
    %112 = tpu.concatenate %89, %90, %110, %111 in 1 : vector<8x8xf32>, vector<8x8xf32>, vector<8x8xf32>, vector<8x8xf32> -> vector<8x32xf32>
    %113 = tpu.concatenate %69, %112 in 0 : vector<8x32xf32>, vector<8x32xf32> -> vector<16x32xf32>
    %114 = vector.extract_strided_slice %2 {offsets = [0, 112], sizes = [32, 32], strides = [1, 1]} : vector<32x144xf32> to vector<32x32xf32>
    %cst_24 = arith.constant dense<0.000000e+00> : vector<16x32xf32>
    %115 = tpu.matmul %113, %114, %cst_24 {dimension_numbers = #tpu.dot_dimension_numbers<[1], [0], [0], [1], [0, 0, 1, 1], [], []>} : vector<16x32xf32>, vector<32x32xf32>, vector<16x32xf32> -> vector<16x32xf32>
    %116 = vector.extract_strided_slice %115 {offsets = [0, 0], sizes = [8, 32], strides = [1, 1]} : vector<16x32xf32> to vector<8x32xf32>
    %c0_25 = arith.constant 0 : index
    %c0_26 = arith.constant 0 : index
    %c0_27 = arith.constant 0 : index
    %117 = vector.load %arg4[%c0_25, %c0_26, %c0_27] : memref<2x8x32xf32, #tpu.memory_space<vmem>>, vector<1x8x32xf32>
    %118 = vector.shape_cast %117 : vector<1x8x32xf32> to vector<8x32xf32>
    %119 = vector.shape_cast %116 : vector<8x32xf32> to vector<1x8x32xf32>
    tpu.vector_store %arg4[%c0_25, %c0_26, %c0_27], %119 {strides = array<i32>} : memref<2x8x32xf32, #tpu.memory_space<vmem>>, vector<1x8x32xf32>,
    %120 = vector.extract_strided_slice %115 {offsets = [8, 0], sizes = [8, 32], strides = [1, 1]} : vector<16x32xf32> to vector<8x32xf32>
    %c1 = arith.constant 1 : index
    %c0_28 = arith.constant 0 : index
    %c0_29 = arith.constant 0 : index
    %121 = vector.load %arg4[%c1, %c0_28, %c0_29] : memref<2x8x32xf32, #tpu.memory_space<vmem>>, vector<1x8x32xf32>
    %122 = vector.shape_cast %121 : vector<1x8x32xf32> to vector<8x32xf32>
    %123 = vector.shape_cast %120 : vector<8x32xf32> to vector<1x8x32xf32>
    tpu.vector_store %arg4[%c1, %c0_28, %c0_29], %123 {strides = array<i32>} : memref<2x8x32xf32, #tpu.memory_space<vmem>>, vector<1x8x32xf32>,
    return
  }
  func.func @transform_0(%arg0: i32) -> (i32, i32, i32) {
    %c0_i32 = arith.constant 0 : i32
    %c0_i32_0 = arith.constant 0 : i32
    %c0_i32_1 = arith.constant 0 : i32
    %c0_i32_2 = arith.constant 0 : i32
    return %c0_i32, %c0_i32_0, %c0_i32_1 : i32, i32, i32
  }
  func.func @transform_1(%arg0: i32) -> (i32, i32) {
    %c0_i32 = arith.constant 0 : i32
    %c0_i32_0 = arith.constant 0 : i32
    %c0_i32_1 = arith.constant 0 : i32
    return %c0_i32, %c0_i32_0 : i32, i32
  }
  func.func @transform_2(%arg0: i32) -> (i32, i32) {
    %c0_i32 = arith.constant 0 : i32
    %c0_i32_0 = arith.constant 0 : i32
    %c0_i32_1 = arith.constant 0 : i32
    return %c0_i32, %c0_i32_0 : i32, i32
  }
  func.func @transform_3(%arg0: i32) -> (i32, i32, i32) {
    %c0_i32 = arith.constant 0 : i32
    %c0_i32_0 = arith.constant 0 : i32
    %c0_i32_1 = arith.constant 0 : i32
    %c0_i32_2 = arith.constant 0 : i32
    return %c0_i32, %c0_i32_0, %c0_i32_1 : i32, i32, i32
  }
}

</mosaic_0001>

<llo_original>
// kernel: fused_forward.1
$region0: #{fused_forward.1}
  #allocation0 [shape = 'u32[]', space=smem, size = 0x4, offset = 0x4, fixed_abs, tag = 'smem constant byte address 0x4 - core index']
  #allocation1 [shape = 'u32[144,128]{1,0:T(1,128)}', space=vmem, size = 0x12000, scoped, tag = 'internal scratch']
  %s0 = inlined_call_operand.hbm [shape: f32[2,8,32], index: 0, kind: input, shape index: {}]
  %s1 = inlined_call_operand.hbm [shape: f32[32,144], index: 1, kind: input, shape index: {}]
  %s2 = inlined_call_operand.hbm [shape: f32[16,72], index: 2, kind: input, shape index: {}]
  %s3 = inlined_call_operand.hbm [shape: f32[2,8,32], index: 3, kind: output, shape index: {}]
  %s4 = sld [smem:[#allocation0]]
  $region34: #{fused_forward.1} parent=0
    _
  %s6 = ssub.s32 1, %s4
  %s7 = scalar_select 0, %s6, %s4
  $region1: #{fused_forward.1} parent=0
    #allocation2 [shape = 'u8[8192]{0}', space=vmem, size = 0x2000, scoped, tag = 'input window, operand 0, single buffered']
    #allocation3 [shape = 's32[1]{0}', space=sflag, size = 0x4, scoped, tag = 'scoped memory for fused_forward.1']
    #allocation4 [shape = 's32[1]{0}', space=sflag, size = 0x4, scoped, tag = 'scoped memory for fused_forward.1']
    #allocation5 [shape = 'u8[32768]{0}', space=vmem, size = 0x8000, scoped, tag = 'input window, operand 1, single buffered']
    #allocation6 [shape = 's32[1]{0}', space=sflag, size = 0x4, scoped, tag = 'scoped memory for fused_forward.1']
    #allocation7 [shape = 'u8[8192]{0}', space=vmem, size = 0x2000, scoped, tag = 'input window, operand 2, single buffered']
    #allocation8 [shape = 'u8[8192]{0}', space=vmem, size = 0x2000, scoped, tag = 'output window, operand 0, single buffered']
    %8 = vsyncpa [#allocation3], 0
    %9 = vsyncpa [#allocation6], 0
    %10 = vsyncpa [#allocation4], 0
    // Predicated region
    $region2: #{fused_forward.1} parent=1 // pred_check
      _
    $region3: #{fused_forward.1} parent=1 // pred_check_branch
      %12 = sbr.rel (0) target = $region5
    $region4: #{fused_forward.1} parent=1 // pred_region
      %s14 = ssub.s32 256, 256
      %15 = vsyncadd [#allocation3], %s14
      %s16 = sshll.u32 [#allocation2], 4
      %s17 = int_to_ptr.vmem [resolvable:$true] %s16
      %22 = dma.hbm_to_vmem [thread:$0]  %s0, 256, %s17, [#allocation3], 128, 128, 8
    $region5: #{fused_forward.1} parent=1 // pred_fallthru
      _
    // Predicated region
    $region6: #{fused_forward.1} parent=1 // pred_check
      _
    $region7: #{fused_forward.1} parent=1 // pred_check_branch
      %24 = sbr.rel (0) target = $region9
    $region8: #{fused_forward.1} parent=1 // pred_region
      %s26 = ssub.s32 1024, 1024
      %27 = vsyncadd [#allocation6], %s26
      %s28 = sshll.u32 [#allocation5], 4
      %s29 = int_to_ptr.vmem [resolvable:$true] %s28
      %34 = dma.hbm_to_vmem [thread:$0]  %s1, 1024, %s29, [#allocation6], 256, 256, 16
    $region9: #{fused_forward.1} parent=1 // pred_fallthru
      _
    // Predicated region
    $region10: #{fused_forward.1} parent=1 // pred_check
      _
    $region11: #{fused_forward.1} parent=1 // pred_check_branch
      %36 = sbr.rel (0) target = $region13
    $region12: #{fused_forward.1} parent=1 // pred_region
      %s38 = ssub.s32 256, 256
      %39 = vsyncadd [#allocation6], %s38
      %s40 = sshll.u32 [#allocation7], 4
      %s41 = int_to_ptr.vmem [resolvable:$true] %s40
      %46 = dma.hbm_to_vmem [thread:$0]  %s2, 256, %s41, [#allocation6], 128, 128, 8
    $region13: #{fused_forward.1} parent=1 // pred_fallthru
      _
    // Predicated region
    $region14: #{fused_forward.1} parent=1 // pred_check
      _
    $region15: #{fused_forward.1} parent=1 // pred_check_branch
      %48 = sbr.rel (0) target = $region17
    $region16: #{fused_forward.1} parent=1 // pred_region
      %49 = dma.done [#allocation3], 256
    $region17: #{fused_forward.1} parent=1 // pred_fallthru
      _
    // Predicated region
    $region18: #{fused_forward.1} parent=1 // pred_check
      _
    $region19: #{fused_forward.1} parent=1 // pred_check_branch
      %51 = sbr.rel (0) target = $region21
    $region20: #{fused_forward.1} parent=1 // pred_region
      %52 = dma.done [#allocation6], 1024
    $region21: #{fused_forward.1} parent=1 // pred_fallthru
      _
    // Predicated region
    $region22: #{fused_forward.1} parent=1 // pred_check
      _
    $region23: #{fused_forward.1} parent=1 // pred_check_branch
      %54 = sbr.rel (0) target = $region25
    $region24: #{fused_forward.1} parent=1 // pred_region
      %55 = dma.done [#allocation6], 256
    $region25: #{fused_forward.1} parent=1 // pred_fallthru
      _
    %v56 = vld [vmem:[#allocation2] sm:$0xff]
    %v57 = vld [vmem:[#allocation2 + $0x8] sm:$0xff]
    %v58 = vld [vmem:[#allocation5] sm:$0xff]
    %v59 = vld [vmem:[#allocation5 + $0x8] sm:$0xff]
    %v60 = vld [vmem:[#allocation5 + $0x10] sm:$0xff]
    %v61 = vld [vmem:[#allocation5 + $0x18] sm:$0xff]
    %v62 = vld [vmem:[#allocation5 + $0x20] sm:$0xff]
    %v63 = vld [vmem:[#allocation5 + $0x28] sm:$0xff]
    %v64 = vld [vmem:[#allocation5 + $0x30] sm:$0xff]
    %v65 = vld [vmem:[#allocation5 + $0x38] sm:$0xff]
    %v66 = vld [vmem:[#allocation7] sm:$0xff]
    %v67 = vld [vmem:[#allocation7 + $0x8] sm:$0xff]
    %vm68 = vcmask 261120
    %v70 = vsel %vm68, %v56, 0
    %v73 = vsel %vm68, %v57, 0
    %75 = vmatprep.subr.mxu0 0.0
    %76 = vmatpush1.msra.mxu0 0.0
    %77 = vmatprep.subr.mxu0 0.0
    %78 = vmatpush1.msra.mxu0 0.0
    %79 = vmatprep.subr.mxu0 0.0
    %80 = vmatpush1.msra.mxu0 0.0
    %81 = vmatprep.subr.mxu0 0.0
    %82 = vmatpush1.msra.mxu0 0.0
    %83 = vmatprep.subr.mxu0 0.0
    %84 = vmatpush1.msra.mxu0 0.0
    %85 = vmatprep.subr.mxu0 0.0
    %86 = vmatpush1.msra.mxu0 0.0
    %87 = vmatprep.subr.mxu0 0.0
    %88 = vmatpush1.msra.mxu0 0.0
    %89 = vmatprep.subr.mxu0 0.0
    %90 = vmatpush1.msra.mxu0 0.0
    %91 = vmatprep.subr.mxu0 0.0
    %92 = vmatpush1.msra.mxu0 0.0
    %93 = vmatprep.subr.mxu0 0.0
    %94 = vmatpush1.msra.mxu0 0.0
    %95 = vmatprep.subr.mxu0 0.0
    %96 = vmatpush1.msra.mxu0 0.0
    %97 = vmatprep.subr.mxu0 0.0
    %98 = vmatpush1.msra.mxu0 0.0
    %99 = vmatprep.subr.mxu0 0.0
    %100 = vmatpush1.msra.mxu0 %v64
    %101 = vmatprep.subr.mxu0 0.0
    %102 = vmatpush1.msra.mxu0 %v62
    %103 = vmatprep.subr.mxu0 0.0
    %104 = vmatpush1.msra.mxu0 %v60
    %105 = vmatprep.subr.mxu0 0.0
    %106 = vmatpush1.msra.mxu0 %v58
    %107 = vmatprep.subr.mxu0 0.0
    %108 = vmatpush2.msra.mxu0 0.0
    %109 = vmatprep.subr.mxu0 0.0
    %110 = vmatpush2.msra.mxu0 0.0
    %111 = vmatprep.subr.mxu0 0.0
    %112 = vmatpush2.msra.mxu0 0.0
    %113 = vmatprep.subr.mxu0 0.0
    %114 = vmatpush2.msra.mxu0 0.0
    %115 = vmatprep.subr.mxu0 0.0
    %116 = vmatpush2.msra.mxu0 0.0
    %117 = vmatprep.subr.mxu0 0.0
    %118 = vmatpush2.msra.mxu0 0.0
    %119 = vmatprep.subr.mxu0 0.0
    %120 = vmatpush2.msra.mxu0 0.0
    %121 = vmatprep.subr.mxu0 0.0
    %122 = vmatpush2.msra.mxu0 0.0
    %123 = vmatprep.subr.mxu0 0.0
    %124 = vmatpush2.msra.mxu0 0.0
    %125 = vmatprep.subr.mxu0 0.0
    %126 = vmatpush2.msra.mxu0 0.0
    %127 = vmatprep.subr.mxu0 0.0
    %128 = vmatpush2.msra.mxu0 0.0
    %129 = vmatprep.subr.mxu0 0.0
    %130 = vmatpush2.msra.mxu0 0.0
    %131 = vmatprep.subr.mxu0 0.0
    %132 = vmatpush2.msra.mxu0 0.0
    %133 = vmatprep.subr.mxu0 0.0
    %134 = vmatpush2.msra.mxu0 0.0
    %135 = vmatprep.subr.mxu0 0.0
    %136 = vmatpush2.msra.mxu0 0.0
    %137 = vmatprep.subr.mxu0 0.0
    %138 = vmatpush2.msra.mxu0 0.0
    %139 = vmatprep.mubr.f32.mxu0 0.0
    %140 = vmatmul.mubr.f32.gmra.mxu0 %v70
    %v141 = vpop.f32.mrf.mxu0
    %v142 = vadd.f32 0.0, %v141
    %v143 = vpop.f32.mrf.mxu0
    %144 = vmatprep.mubr.f32.mxu0 0.0
    %145 = vmatmul.mubr.f32.gmra.mxu0 %v73
    %v146 = vpop.f32.mrf.mxu0
    %v147 = vadd.f32 0.0, %v146
    %v148 = vpop.f32.mrf.mxu0
    %149 = vdwg.mxu0
    %v150 = vmul.f32 %v142, %v66
    %v151 = vmul.f32 %v147, %v67
    %154 = vrot.lane.b32.xlu0 %v150, 96
    %v155 = vpop.permute.xlu0 %154
    %156 = vrot.lane.b32.xlu0 %v151, 96
    %v157 = vpop.permute.xlu0 %156
    %v160 = vadd.f32 %v150, %v155
    %v161 = vadd.f32 %v151, %v157
    %v162 = vxor.u32 %v142, 2147483648
    %v163 = vxor.u32 %v147, 2147483648
    %v164 = vmul.f32 %v162, 1.442695
    %v165 = vpow.pop %v164
    %v166 = vmul.f32 %v163, 1.442695
    %v167 = vpow.pop %v166
    %v168 = vadd.f32 %v165, 1.0
    %v169 = vadd.f32 %v167, 1.0
    %v170 = vrcp.pop %v168
    %v171 = vmul.f32 1.0, %v170
    %v172 = vrcp.pop %v169
    %v173 = vmul.f32 1.0, %v172
    %v174 = vmul.f32 %v142, %v171
    %v175 = vmul.f32 %v147, %v173
    %178 = vrot.lane.b32.xlu0 %v174, 56
    %v179 = vpop.permute.xlu0 %178
    %180 = vrot.lane.b32.xlu0 %v175, 56
    %v181 = vpop.permute.xlu0 %180
    %184 = vrot.lane.b32.xlu0 %v58, 40
    %v185 = vpop.permute.xlu0 %184
    %186 = vrot.lane.b32.xlu0 %v60, 40
    %v187 = vpop.permute.xlu0 %186
    %vm190 = vcmask 130048
    %v191 = vsel %vm190, %v179, 0
    %v193 = vsel %vm190, %v181, 0
    %195 = vmatprep.subr.mxu0 0.0
    %196 = vmatpush1.msra.mxu0 0.0
    %197 = vmatprep.subr.mxu0 0.0
    %198 = vmatpush1.msra.mxu0 0.0
    %199 = vmatprep.subr.mxu0 0.0
    %200 = vmatpush1.msra.mxu0 0.0
    %201 = vmatprep.subr.mxu0 0.0
    %202 = vmatpush1.msra.mxu0 0.0
    %203 = vmatprep.subr.mxu0 0.0
    %204 = vmatpush1.msra.mxu0 0.0
    %205 = vmatprep.subr.mxu0 0.0
    %206 = vmatpush1.msra.mxu0 0.0
    %207 = vmatprep.subr.mxu0 0.0
    %208 = vmatpush1.msra.mxu0 0.0
    %209 = vmatprep.subr.mxu0 0.0
    %210 = vmatpush1.msra.mxu0 0.0
    %211 = vmatprep.subr.mxu0 0.0
    %212 = vmatpush1.msra.mxu0 0.0
    %213 = vmatprep.subr.mxu0 0.0
    %214 = vmatpush1.msra.mxu0 0.0
    %215 = vmatprep.subr.mxu0 0.0
    %216 = vmatpush1.msra.mxu0 0.0
    %217 = vmatprep.subr.mxu0 0.0
    %218 = vmatpush1.msra.mxu0 0.0
    %219 = vmatprep.subr.mxu0 0.0
    %220 = vmatpush1.msra.mxu0 0.0
    %221 = vmatprep.subr.mxu0 0.0
    %222 = vmatpush1.msra.mxu0 0.0
    %223 = vmatprep.subr.mxu0 0.0
    %224 = vmatpush1.msra.mxu0 %v187
    %225 = vmatprep.subr.mxu0 0.0
    %226 = vmatpush1.msra.mxu0 %v185
    %227 = vmatprep.subr.mxu0 0.0
    %228 = vmatpush2.msra.mxu0 0.0
    %229 = vmatprep.subr.mxu0 0.0
    %230 = vmatpush2.msra.mxu0 0.0
    %231 = vmatprep.subr.mxu0 0.0
    %232 = vmatpush2.msra.mxu0 0.0
    %233 = vmatprep.subr.mxu0 0.0
    %234 = vmatpush2.msra.mxu0 0.0
    %235 = vmatprep.subr.mxu0 0.0
    %236 = vmatpush2.msra.mxu0 0.0
    %237 = vmatprep.subr.mxu0 0.0
    %238 = vmatpush2.msra.mxu0 0.0
    %239 = vmatprep.subr.mxu0 0.0
    %240 = vmatpush2.msra.mxu0 0.0
    %241 = vmatprep.subr.mxu0 0.0
    %242 = vmatpush2.msra.mxu0 0.0
    %243 = vmatprep.subr.mxu0 0.0
    %244 = vmatpush2.msra.mxu0 0.0
    %245 = vmatprep.subr.mxu0 0.0
    %246 = vmatpush2.msra.mxu0 0.0
    %247 = vmatprep.subr.mxu0 0.0
    %248 = vmatpush2.msra.mxu0 0.0
    %249 = vmatprep.subr.mxu0 0.0
    %250 = vmatpush2.msra.mxu0 0.0
    %251 = vmatprep.subr.mxu0 0.0
    %252 = vmatpush2.msra.mxu0 0.0
    %253 = vmatprep.subr.mxu0 0.0
    %254 = vmatpush2.msra.mxu0 0.0
    %255 = vmatprep.subr.mxu0 0.0
    %256 = vmatpush2.msra.mxu0 0.0
    %257 = vmatprep.subr.mxu0 0.0
    %258 = vmatpush2.msra.mxu0 0.0
    %259 = vmatprep.mubr.f32.mxu0 0.0
    %260 = vmatmul.mubr.f32.gmra.mxu0 %v191
    %v261 = vpop.f32.mrf.mxu0
    %v262 = vadd.f32 0.0, %v261
    %v263 = vpop.f32.mrf.mxu0
    %264 = vmatprep.mubr.f32.mxu0 0.0
    %265 = vmatmul.mubr.f32.gmra.mxu0 %v193
    %v266 = vpop.f32.mrf.mxu0
    %v267 = vadd.f32 0.0, %v266
    %v268 = vpop.f32.mrf.mxu0
    %269 = vdwg.mxu0
    %270 = vrot.lane.b32.xlu0 %v150, 64
    %v271 = vpop.permute.xlu0 %270
    %274 = vrot.lane.b32.xlu0 %v262, 4
    %v275 = vpop.permute.xlu0 %274
    %vm277 = vcmask 31744
    %v278 = vsel %vm277, %v271, %v275
    %280 = vrot.lane.b32.xlu0 %v160, 120
    %v281 = vpop.permute.xlu0 %280
    %vm282 = vcmask 64512
    %v283 = vsel %vm282, %v160, 0
    %v285 = vsel %vm282, %v281, 0
    %v288 = vsel %vm282, %v278, 0
    %290 = vmatprep.subr.mxu0 0.0
    %291 = vmatpush1.xpose.msra.mxu0 0.0
    %292 = vmatprep.subr.mxu0 0.0
    %293 = vmatpush1.xpose.msra.mxu0 0.0
    %294 = vmatprep.subr.mxu0 0.0
    %295 = vmatpush1.xpose.msra.mxu0 0.0
    %296 = vmatprep.subr.mxu0 0.0
    %297 = vmatpush1.xpose.msra.mxu0 0.0
    %298 = vmatprep.subr.mxu0 0.0
    %299 = vmatpush1.xpose.msra.mxu0 0.0
    %300 = vmatprep.subr.mxu0 0.0
    %301 = vmatpush1.xpose.msra.mxu0 0.0
    %302 = vmatprep.subr.mxu0 0.0
    %303 = vmatpush1.xpose.msra.mxu0 0.0
    %304 = vmatprep.subr.mxu0 0.0
    %305 = vmatpush1.xpose.msra.mxu0 0.0
    %306 = vmatprep.subr.mxu0 0.0
    %307 = vmatpush1.xpose.msra.mxu0 0.0
    %308 = vmatprep.subr.mxu0 0.0
    %309 = vmatpush1.xpose.msra.mxu0 0.0
    %310 = vmatprep.subr.mxu0 0.0
    %311 = vmatpush1.xpose.msra.mxu0 0.0
    %312 = vmatprep.subr.mxu0 0.0
    %313 = vmatpush1.xpose.msra.mxu0 0.0
    %314 = vmatprep.subr.mxu0 0.0
    %315 = vmatpush1.xpose.msra.mxu0 0.0
    %316 = vmatprep.subr.mxu0 0.0
    %317 = vmatpush1.xpose.msra.mxu0 0.0
    %318 = vmatprep.subr.mxu0 0.0
    %319 = vmatpush1.xpose.msra.mxu0 0.0
    %320 = vmatprep.subr.mxu0 0.0
    %321 = vmatpush1.xpose.msra.mxu0 %v288
    %322 = vmatprep.subr.mxu0 0.0
    %323 = vmatpush2.xpose.msra.mxu0 0.0
    %324 = vmatprep.subr.mxu0 0.0
    %325 = vmatpush2.xpose.msra.mxu0 0.0
    %326 = vmatprep.subr.mxu0 0.0
    %327 = vmatpush2.xpose.msra.mxu0 0.0
    %328 = vmatprep.subr.mxu0 0.0
    %329 = vmatpush2.xpose.msra.mxu0 0.0
    %330 = vmatprep.subr.mxu0 0.0
    %331 = vmatpush2.xpose.msra.mxu0 0.0
    %332 = vmatprep.subr.mxu0 0.0
    %333 = vmatpush2.xpose.msra.mxu0 0.0
    %334 = vmatprep.subr.mxu0 0.0
    %335 = vmatpush2.xpose.msra.mxu0 0.0
    %336 = vmatprep.subr.mxu0 0.0
    %337 = vmatpush2.xpose.msra.mxu0 0.0
    %338 = vmatprep.subr.mxu0 0.0
    %339 = vmatpush2.xpose.msra.mxu0 0.0
    %340 = vmatprep.subr.mxu0 0.0
    %341 = vmatpush2.xpose.msra.mxu0 0.0
    %342 = vmatprep.subr.mxu0 0.0
    %343 = vmatpush2.xpose.msra.mxu0 0.0
    %344 = vmatprep.subr.mxu0 0.0
    %345 = vmatpush2.xpose.msra.mxu0 0.0
    %346 = vmatprep.subr.mxu0 0.0
    %347 = vmatpush2.xpose.msra.mxu0 0.0
    %348 = vmatprep.subr.mxu0 0.0
    %349 = vmatpush2.xpose.msra.mxu0 0.0
    %350 = vmatprep.subr.mxu0 0.0
    %351 = vmatpush2.xpose.msra.mxu0 0.0
    %352 = vmatprep.subr.mxu0 0.0
    %353 = vmatpush2.xpose.msra.mxu0 0.0
    %354 = vmatprep.mubr.f32.mxu0 0.0
    %355 = vmatmul.mubr.f32.gmra.mxu0 %v283
    %v356 = vpop.f32.mrf.mxu0
    %v357 = vadd.f32 0.0, %v356
    %v358 = vpop.f32.mrf.mxu0
    %359 = vmatprep.mubr.f32.mxu0 0.0
    %360 = vmatmul.mubr.f32.gmra.mxu0 %v285
    %v361 = vpop.f32.mrf.mxu0
    %v362 = vadd.f32 0.0, %v361
    %v363 = vpop.f32.mrf.mxu0
    %364 = vdwg.mxu0
    %v365 = vsel %vm282, %v357, -inf
    %366 = vmax.xlane.f32.xlu0 %v365
    %v367 = vpop.xlane.xlu0 %366
    %v368 = vsel %vm282, %v362, -inf
    %369 = vmax.xlane.f32.xlu0 %v368
    %v370 = vpop.xlane.xlu0 %369
    %v371 = vsub.f32 %v357, %v367
    %v372 = vsub.f32 %v362, %v370
    %v373 = vmul.f32 %v371, 1.442695
    %v374 = vpow.pop %v373
    %v375 = vmul.f32 %v372, 1.442695
    %v376 = vpow.pop %v375
    %v377 = vsel %vm282, %v374, 0.0
    %378 = vadd.xlane.f32.xlu0 %v377
    %v379 = vpop.xlane.xlu0 %378
    %v380 = vsel %vm282, %v376, 0.0
    %381 = vadd.xlane.f32.xlu0 %v380
    %v382 = vpop.xlane.xlu0 %381
    %v383 = vrcp.pop %v379
    %v384 = vrcp.pop %v382
    %v385 = vmul.f32 %v374, %v383
    %v386 = vmul.f32 %v376, %v384
    %387 = vrot.lane.b32.xlu0 %v262, 120
    %v388 = vpop.permute.xlu0 %387
    %v391 = vsel %vm282, %v385, 0
    %v394 = vsel %vm282, %v386, 0
    %396 = vmatprep.subr.mxu0 0.0
    %397 = vmatpush1.msra.mxu0 0.0
    %398 = vmatprep.subr.mxu0 0.0
    %399 = vmatpush1.msra.mxu0 0.0
    %400 = vmatprep.subr.mxu0 0.0
    %401 = vmatpush1.msra.mxu0 0.0
    %402 = vmatprep.subr.mxu0 0.0
    %403 = vmatpush1.msra.mxu0 0.0
    %404 = vmatprep.subr.mxu0 0.0
    %405 = vmatpush1.msra.mxu0 0.0
    %406 = vmatprep.subr.mxu0 0.0
    %407 = vmatpush1.msra.mxu0 0.0
    %408 = vmatprep.subr.mxu0 0.0
    %409 = vmatpush1.msra.mxu0 0.0
    %410 = vmatprep.subr.mxu0 0.0
    %411 = vmatpush1.msra.mxu0 0.0
    %412 = vmatprep.subr.mxu0 0.0
    %413 = vmatpush1.msra.mxu0 0.0
    %414 = vmatprep.subr.mxu0 0.0
    %415 = vmatpush1.msra.mxu0 0.0
    %416 = vmatprep.subr.mxu0 0.0
    %417 = vmatpush1.msra.mxu0 0.0
    %418 = vmatprep.subr.mxu0 0.0
    %419 = vmatpush1.msra.mxu0 0.0
    %420 = vmatprep.subr.mxu0 0.0
    %421 = vmatpush1.msra.mxu0 0.0
    %422 = vmatprep.subr.mxu0 0.0
    %423 = vmatpush1.msra.mxu0 0.0
    %424 = vmatprep.subr.mxu0 0.0
    %425 = vmatpush1.msra.mxu0 0.0
    %426 = vmatprep.subr.mxu0 0.0
    %427 = vmatpush1.msra.mxu0 %v388
    %428 = vmatprep.subr.mxu0 0.0
    %429 = vmatpush2.msra.mxu0 0.0
    %430 = vmatprep.subr.mxu0 0.0
    %431 = vmatpush2.msra.mxu0 0.0
    %432 = vmatprep.subr.mxu0 0.0
    %433 = vmatpush2.msra.mxu0 0.0
    %434 = vmatprep.subr.mxu0 0.0
    %435 = vmatpush2.msra.mxu0 0.0
    %436 = vmatprep.subr.mxu0 0.0
    %437 = vmatpush2.msra.mxu0 0.0
    %438 = vmatprep.subr.mxu0 0.0
    %439 = vmatpush2.msra.mxu0 0.0
    %440 = vmatprep.subr.mxu0 0.0
    %441 = vmatpush2.msra.mxu0 0.0
    %442 = vmatprep.subr.mxu0 0.0
    %443 = vmatpush2.msra.mxu0 0.0
    %444 = vmatprep.subr.mxu0 0.0
    %445 = vmatpush2.msra.mxu0 0.0
    %446 = vmatprep.subr.mxu0 0.0
    %447 = vmatpush2.msra.mxu0 0.0
    %448 = vmatprep.subr.mxu0 0.0
    %449 = vmatpush2.msra.mxu0 0.0
    %450 = vmatprep.subr.mxu0 0.0
    %451 = vmatpush2.msra.mxu0 0.0
    %452 = vmatprep.subr.mxu0 0.0
    %453 = vmatpush2.msra.mxu0 0.0
    %454 = vmatprep.subr.mxu0 0.0
    %455 = vmatpush2.msra.mxu0 0.0
    %456 = vmatprep.subr.mxu0 0.0
    %457 = vmatpush2.msra.mxu0 0.0
    %458 = vmatprep.subr.mxu0 0.0
    %459 = vmatpush2.msra.mxu0 0.0
    %460 = vmatprep.mubr.f32.mxu0 0.0
    %461 = vmatmul.mubr.f32.gmra.mxu0 %v391
    %v462 = vpop.f32.mrf.mxu0
    %v463 = vadd.f32 0.0, %v462
    %v464 = vpop.f32.mrf.mxu0
    %465 = vmatprep.mubr.f32.mxu0 0.0
    %466 = vmatmul.mubr.f32.gmra.mxu0 %v394
    %v467 = vpop.f32.mrf.mxu0
    %v468 = vadd.f32 0.0, %v467
    %v469 = vpop.f32.mrf.mxu0
    %470 = vdwg.mxu0
    %471 = vrot.lane.b32.xlu0 %v150, 60
    %v472 = vpop.permute.xlu0 %471
    %v474 = vsel %vm277, %v472, %v262
    %475 = vrot.lane.b32.xlu0 %v160, 112
    %v476 = vpop.permute.xlu0 %475
    %477 = vrot.lane.b32.xlu0 %v281, 112
    %v478 = vpop.permute.xlu0 %477
    %v479 = vsel %vm282, %v476, 0
    %v481 = vsel %vm282, %v478, 0
    %v484 = vsel %vm282, %v474, 0
    %486 = vmatprep.subr.mxu0 0.0
    %487 = vmatpush1.xpose.msra.mxu0 0.0
    %488 = vmatprep.subr.mxu0 0.0
    %489 = vmatpush1.xpose.msra.mxu0 0.0
    %490 = vmatprep.subr.mxu0 0.0
    %491 = vmatpush1.xpose.msra.mxu0 0.0
    %492 = vmatprep.subr.mxu0 0.0
    %493 = vmatpush1.xpose.msra.mxu0 0.0
    %494 = vmatprep.subr.mxu0 0.0
    %495 = vmatpush1.xpose.msra.mxu0 0.0
    %496 = vmatprep.subr.mxu0 0.0
    %497 = vmatpush1.xpose.msra.mxu0 0.0
    %498 = vmatprep.subr.mxu0 0.0
    %499 = vmatpush1.xpose.msra.mxu0 0.0
    %500 = vmatprep.subr.mxu0 0.0
    %501 = vmatpush1.xpose.msra.mxu0 0.0
    %502 = vmatprep.subr.mxu0 0.0
    %503 = vmatpush1.xpose.msra.mxu0 0.0
    %504 = vmatprep.subr.mxu0 0.0
    %505 = vmatpush1.xpose.msra.mxu0 0.0
    %506 = vmatprep.subr.mxu0 0.0
    %507 = vmatpush1.xpose.msra.mxu0 0.0
    %508 = vmatprep.subr.mxu0 0.0
    %509 = vmatpush1.xpose.msra.mxu0 0.0
    %510 = vmatprep.subr.mxu0 0.0
    %511 = vmatpush1.xpose.msra.mxu0 0.0
    %512 = vmatprep.subr.mxu0 0.0
    %513 = vmatpush1.xpose.msra.mxu0 0.0
    %514 = vmatprep.subr.mxu0 0.0
    %515 = vmatpush1.xpose.msra.mxu0 0.0
    %516 = vmatprep.subr.mxu0 0.0
    %517 = vmatpush1.xpose.msra.mxu0 %v484
    %518 = vmatprep.subr.mxu0 0.0
    %519 = vmatpush2.xpose.msra.mxu0 0.0
    %520 = vmatprep.subr.mxu0 0.0
    %521 = vmatpush2.xpose.msra.mxu0 0.0
    %522 = vmatprep.subr.mxu0 0.0
    %523 = vmatpush2.xpose.msra.mxu0 0.0
    %524 = vmatprep.subr.mxu0 0.0
    %525 = vmatpush2.xpose.msra.mxu0 0.0
    %526 = vmatprep.subr.mxu0 0.0
    %527 = vmatpush2.xpose.msra.mxu0 0.0
    %528 = vmatprep.subr.mxu0 0.0
    %529 = vmatpush2.xpose.msra.mxu0 0.0
    %530 = vmatprep.subr.mxu0 0.0
    %531 = vmatpush2.xpose.msra.mxu0 0.0
    %532 = vmatprep.subr.mxu0 0.0
    %533 = vmatpush2.xpose.msra.mxu0 0.0
    %534 = vmatprep.subr.mxu0 0.0
    %535 = vmatpush2.xpose.msra.mxu0 0.0
    %536 = vmatprep.subr.mxu0 0.0
    %537 = vmatpush2.xpose.msra.mxu0 0.0
    %538 = vmatprep.subr.mxu0 0.0
    %539 = vmatpush2.xpose.msra.mxu0 0.0
    %540 = vmatprep.subr.mxu0 0.0
    %541 = vmatpush2.xpose.msra.mxu0 0.0
    %542 = vmatprep.subr.mxu0 0.0
    %543 = vmatpush2.xpose.msra.mxu0 0.0
    %544 = vmatprep.subr.mxu0 0.0
    %545 = vmatpush2.xpose.msra.mxu0 0.0
    %546 = vmatprep.subr.mxu0 0.0
    %547 = vmatpush2.xpose.msra.mxu0 0.0
    %548 = vmatprep.subr.mxu0 0.0
    %549 = vmatpush2.xpose.msra.mxu0 0.0
    %550 = vmatprep.mubr.f32.mxu0 0.0
    %551 = vmatmul.mubr.f32.gmra.mxu0 %v479
    %v552 = vpop.f32.mrf.mxu0
    %v553 = vadd.f32 0.0, %v552
    %v554 = vpop.f32.mrf.mxu0
    %555 = vmatprep.mubr.f32.mxu0 0.0
    %556 = vmatmul.mubr.f32.gmra.mxu0 %v481
    %v557 = vpop.f32.mrf.mxu0
    %v558 = vadd.f32 0.0, %v557
    %v559 = vpop.f32.mrf.mxu0
    %560 = vdwg.mxu0
    %v561 = vsel %vm282, %v553, -inf
    %562 = vmax.xlane.f32.xlu0 %v561
    %v563 = vpop.xlane.xlu0 %562
    %v564 = vsel %vm282, %v558, -inf
    %565 = vmax.xlane.f32.xlu0 %v564
    %v566 = vpop.xlane.xlu0 %565
    %v567 = vsub.f32 %v553, %v563
    %v568 = vsub.f32 %v558, %v566
    %v569 = vmul.f32 %v567, 1.442695
    %v570 = vpow.pop %v569
    %v571 = vmul.f32 %v568, 1.442695
    %v572 = vpow.pop %v571
    %v573 = vsel %vm282, %v570, 0.0
    %574 = vadd.xlane.f32.xlu0 %v573
    %v575 = vpop.xlane.xlu0 %574
    %v576 = vsel %vm282, %v572, 0.0
    %577 = vadd.xlane.f32.xlu0 %v576
    %v578 = vpop.xlane.xlu0 %577
    %v579 = vrcp.pop %v575
    %v580 = vrcp.pop %v578
    %v581 = vmul.f32 %v570, %v579
    %v582 = vmul.f32 %v572, %v580
    %583 = vrot.lane.b32.xlu0 %v262, 112
    %v584 = vpop.permute.xlu0 %583
    %v587 = vsel %vm282, %v581, 0
    %v590 = vsel %vm282, %v582, 0
    %592 = vmatprep.subr.mxu0 0.0
    %593 = vmatpush1.msra.mxu0 0.0
    %594 = vmatprep.subr.mxu0 0.0
    %595 = vmatpush1.msra.mxu0 0.0
    %596 = vmatprep.subr.mxu0 0.0
    %597 = vmatpush1.msra.mxu0 0.0
    %598 = vmatprep.subr.mxu0 0.0
    %599 = vmatpush1.msra.mxu0 0.0
    %600 = vmatprep.subr.mxu0 0.0
    %601 = vmatpush1.msra.mxu0 0.0
    %602 = vmatprep.subr.mxu0 0.0
    %603 = vmatpush1.msra.mxu0 0.0
    %604 = vmatprep.subr.mxu0 0.0
    %605 = vmatpush1.msra.mxu0 0.0
    %606 = vmatprep.subr.mxu0 0.0
    %607 = vmatpush1.msra.mxu0 0.0
    %608 = vmatprep.subr.mxu0 0.0
    %609 = vmatpush1.msra.mxu0 0.0
    %610 = vmatprep.subr.mxu0 0.0
    %611 = vmatpush1.msra.mxu0 0.0
    %612 = vmatprep.subr.mxu0 0.0
    %613 = vmatpush1.msra.mxu0 0.0
    %614 = vmatprep.subr.mxu0 0.0
    %615 = vmatpush1.msra.mxu0 0.0
    %616 = vmatprep.subr.mxu0 0.0
    %617 = vmatpush1.msra.mxu0 0.0
    %618 = vmatprep.subr.mxu0 0.0
    %619 = vmatpush1.msra.mxu0 0.0
    %620 = vmatprep.subr.mxu0 0.0
    %621 = vmatpush1.msra.mxu0 0.0
    %622 = vmatprep.subr.mxu0 0.0
    %623 = vmatpush1.msra.mxu0 %v584
    %624 = vmatprep.subr.mxu0 0.0
    %625 = vmatpush2.msra.mxu0 0.0
    %626 = vmatprep.subr.mxu0 0.0
    %627 = vmatpush2.msra.mxu0 0.0
    %628 = vmatprep.subr.mxu0 0.0
    %629 = vmatpush2.msra.mxu0 0.0
    %630 = vmatprep.subr.mxu0 0.0
    %631 = vmatpush2.msra.mxu0 0.0
    %632 = vmatprep.subr.mxu0 0.0
    %633 = vmatpush2.msra.mxu0 0.0
    %634 = vmatprep.subr.mxu0 0.0
    %635 = vmatpush2.msra.mxu0 0.0
    %636 = vmatprep.subr.mxu0 0.0
    %637 = vmatpush2.msra.mxu0 0.0
    %638 = vmatprep.subr.mxu0 0.0
    %639 = vmatpush2.msra.mxu0 0.0
    %640 = vmatprep.subr.mxu0 0.0
    %641 = vmatpush2.msra.mxu0 0.0
    %642 = vmatprep.subr.mxu0 0.0
    %643 = vmatpush2.msra.mxu0 0.0
    %644 = vmatprep.subr.mxu0 0.0
    %645 = vmatpush2.msra.mxu0 0.0
    %646 = vmatprep.subr.mxu0 0.0
    %647 = vmatpush2.msra.mxu0 0.0
    %648 = vmatprep.subr.mxu0 0.0
    %649 = vmatpush2.msra.mxu0 0.0
    %650 = vmatprep.subr.mxu0 0.0
    %651 = vmatpush2.msra.mxu0 0.0
    %652 = vmatprep.subr.mxu0 0.0
    %653 = vmatpush2.msra.mxu0 0.0
    %654 = vmatprep.subr.mxu0 0.0
    %655 = vmatpush2.msra.mxu0 0.0
    %656 = vmatprep.mubr.f32.mxu0 0.0
    %657 = vmatmul.mubr.f32.gmra.mxu0 %v587
    %v658 = vpop.f32.mrf.mxu0
    %v659 = vadd.f32 0.0, %v658
    %v660 = vpop.f32.mrf.mxu0
    %661 = vmatprep.mubr.f32.mxu0 0.0
    %662 = vmatmul.mubr.f32.gmra.mxu0 %v590
    %v663 = vpop.f32.mrf.mxu0
    %v664 = vadd.f32 0.0, %v663
    %v665 = vpop.f32.mrf.mxu0
    %666 = vdwg.mxu0
    %668 = vrot.lane.b32.xlu0 %v468, 8
    %v669 = vpop.permute.xlu0 %668
    %672 = vrot.lane.b32.xlu0 %v659, 16
    %v673 = vpop.permute.xlu0 %672
    %676 = vrot.lane.b32.xlu0 %v664, 24
    %v677 = vpop.permute.xlu0 %676
    %v679 = vsel %vm282, %v463, %v669
    %v680 = vsel %vm190, %v679, %v673
    %vm681 = vcmask 195584
    %v682 = vsel %vm681, %v680, %v677
    %683 = vrot.lane.b32.xlu0 %v151, 64
    %v684 = vpop.permute.xlu0 %683
    %687 = vrot.lane.b32.xlu0 %v267, 4
    %v688 = vpop.permute.xlu0 %687
    %v690 = vsel %vm277, %v684, %v688
    %692 = vrot.lane.b32.xlu0 %v161, 120
    %v693 = vpop.permute.xlu0 %692
    %v694 = vsel %vm282, %v161, 0
    %v696 = vsel %vm282, %v693, 0
    %v699 = vsel %vm282, %v690, 0
    %701 = vmatprep.subr.mxu0 0.0
    %702 = vmatpush1.xpose.msra.mxu0 0.0
    %703 = vmatprep.subr.mxu0 0.0
    %704 = vmatpush1.xpose.msra.mxu0 0.0
    %705 = vmatprep.subr.mxu0 0.0
    %706 = vmatpush1.xpose.msra.mxu0 0.0
    %707 = vmatprep.subr.mxu0 0.0
    %708 = vmatpush1.xpose.msra.mxu0 0.0
    %709 = vmatprep.subr.mxu0 0.0
    %710 = vmatpush1.xpose.msra.mxu0 0.0
    %711 = vmatprep.subr.mxu0 0.0
    %712 = vmatpush1.xpose.msra.mxu0 0.0
    %713 = vmatprep.subr.mxu0 0.0
    %714 = vmatpush1.xpose.msra.mxu0 0.0
    %715 = vmatprep.subr.mxu0 0.0
    %716 = vmatpush1.xpose.msra.mxu0 0.0
    %717 = vmatprep.subr.mxu0 0.0
    %718 = vmatpush1.xpose.msra.mxu0 0.0
    %719 = vmatprep.subr.mxu0 0.0
    %720 = vmatpush1.xpose.msra.mxu0 0.0
    %721 = vmatprep.subr.mxu0 0.0
    %722 = vmatpush1.xpose.msra.mxu0 0.0
    %723 = vmatprep.subr.mxu0 0.0
    %724 = vmatpush1.xpose.msra.mxu0 0.0
    %725 = vmatprep.subr.mxu0 0.0
    %726 = vmatpush1.xpose.msra.mxu0 0.0
    %727 = vmatprep.subr.mxu0 0.0
    %728 = vmatpush1.xpose.msra.mxu0 0.0
    %729 = vmatprep.subr.mxu0 0.0
    %730 = vmatpush1.xpose.msra.mxu0 0.0
    %731 = vmatprep.subr.mxu0 0.0
    %732 = vmatpush1.xpose.msra.mxu0 %v699
    %733 = vmatprep.subr.mxu0 0.0
    %734 = vmatpush2.xpose.msra.mxu0 0.0
    %735 = vmatprep.subr.mxu0 0.0
    %736 = vmatpush2.xpose.msra.mxu0 0.0
    %737 = vmatprep.subr.mxu0 0.0
    %738 = vmatpush2.xpose.msra.mxu0 0.0
    %739 = vmatprep.subr.mxu0 0.0
    %740 = vmatpush2.xpose.msra.mxu0 0.0
    %741 = vmatprep.subr.mxu0 0.0
    %742 = vmatpush2.xpose.msra.mxu0 0.0
    %743 = vmatprep.subr.mxu0 0.0
    %744 = vmatpush2.xpose.msra.mxu0 0.0
    %745 = vmatprep.subr.mxu0 0.0
    %746 = vmatpush2.xpose.msra.mxu0 0.0
    %747 = vmatprep.subr.mxu0 0.0
    %748 = vmatpush2.xpose.msra.mxu0 0.0
    %749 = vmatprep.subr.mxu0 0.0
    %750 = vmatpush2.xpose.msra.mxu0 0.0
    %751 = vmatprep.subr.mxu0 0.0
    %752 = vmatpush2.xpose.msra.mxu0 0.0
    %753 = vmatprep.subr.mxu0 0.0
    %754 = vmatpush2.xpose.msra.mxu0 0.0
    %755 = vmatprep.subr.mxu0 0.0
    %756 = vmatpush2.xpose.msra.mxu0 0.0
    %757 = vmatprep.subr.mxu0 0.0
    %758 = vmatpush2.xpose.msra.mxu0 0.0
    %759 = vmatprep.subr.mxu0 0.0
    %760 = vmatpush2.xpose.msra.mxu0 0.0
    %761 = vmatprep.subr.mxu0 0.0
    %762 = vmatpush2.xpose.msra.mxu0 0.0
    %763 = vmatprep.subr.mxu0 0.0
    %764 = vmatpush2.xpose.msra.mxu0 0.0
    %765 = vmatprep.mubr.f32.mxu0 0.0
    %766 = vmatmul.mubr.f32.gmra.mxu0 %v694
    %v767 = vpop.f32.mrf.mxu0
    %v768 = vadd.f32 0.0, %v767
    %v769 = vpop.f32.mrf.mxu0
    %770 = vmatprep.mubr.f32.mxu0 0.0
    %771 = vmatmul.mubr.f32.gmra.mxu0 %v696
    %v772 = vpop.f32.mrf.mxu0
    %v773 = vadd.f32 0.0, %v772
    %v774 = vpop.f32.mrf.mxu0
    %775 = vdwg.mxu0
    %v776 = vsel %vm282, %v768, -inf
    %777 = vmax.xlane.f32.xlu0 %v776
    %v778 = vpop.xlane.xlu0 %777
    %v779 = vsel %vm282, %v773, -inf
    %780 = vmax.xlane.f32.xlu0 %v779
    %v781 = vpop.xlane.xlu0 %780
    %v782 = vsub.f32 %v768, %v778
    %v783 = vsub.f32 %v773, %v781
    %v784 = vmul.f32 %v782, 1.442695
    %v785 = vpow.pop %v784
    %v786 = vmul.f32 %v783, 1.442695
    %v787 = vpow.pop %v786
    %v788 = vsel %vm282, %v785, 0.0
    %789 = vadd.xlane.f32.xlu0 %v788
    %v790 = vpop.xlane.xlu0 %789
    %v791 = vsel %vm282, %v787, 0.0
    %792 = vadd.xlane.f32.xlu0 %v791
    %v793 = vpop.xlane.xlu0 %792
    %v794 = vrcp.pop %v790
    %v795 = vrcp.pop %v793
    %v796 = vmul.f32 %v785, %v794
    %v797 = vmul.f32 %v787, %v795
    %798 = vrot.lane.b32.xlu0 %v267, 120
    %v799 = vpop.permute.xlu0 %798
    %v802 = vsel %vm282, %v796, 0
    %v805 = vsel %vm282, %v797, 0
    %807 = vmatprep.subr.mxu0 0.0
    %808 = vmatpush1.msra.mxu0 0.0
    %809 = vmatprep.subr.mxu0 0.0
    %810 = vmatpush1.msra.mxu0 0.0
    %811 = vmatprep.subr.mxu0 0.0
    %812 = vmatpush1.msra.mxu0 0.0
    %813 = vmatprep.subr.mxu0 0.0
    %814 = vmatpush1.msra.mxu0 0.0
    %815 = vmatprep.subr.mxu0 0.0
    %816 = vmatpush1.msra.mxu0 0.0
    %817 = vmatprep.subr.mxu0 0.0
    %818 = vmatpush1.msra.mxu0 0.0
    %819 = vmatprep.subr.mxu0 0.0
    %820 = vmatpush1.msra.mxu0 0.0
    %821 = vmatprep.subr.mxu0 0.0
    %822 = vmatpush1.msra.mxu0 0.0
    %823 = vmatprep.subr.mxu0 0.0
    %824 = vmatpush1.msra.mxu0 0.0
    %825 = vmatprep.subr.mxu0 0.0
    %826 = vmatpush1.msra.mxu0 0.0
    %827 = vmatprep.subr.mxu0 0.0
    %828 = vmatpush1.msra.mxu0 0.0
    %829 = vmatprep.subr.mxu0 0.0
    %830 = vmatpush1.msra.mxu0 0.0
    %831 = vmatprep.subr.mxu0 0.0
    %832 = vmatpush1.msra.mxu0 0.0
    %833 = vmatprep.subr.mxu0 0.0
    %834 = vmatpush1.msra.mxu0 0.0
    %835 = vmatprep.subr.mxu0 0.0
    %836 = vmatpush1.msra.mxu0 0.0
    %837 = vmatprep.subr.mxu0 0.0
    %838 = vmatpush1.msra.mxu0 %v799
    %839 = vmatprep.subr.mxu0 0.0
    %840 = vmatpush2.msra.mxu0 0.0
    %841 = vmatprep.subr.mxu0 0.0
    %842 = vmatpush2.msra.mxu0 0.0
    %843 = vmatprep.subr.mxu0 0.0
    %844 = vmatpush2.msra.mxu0 0.0
    %845 = vmatprep.subr.mxu0 0.0
    %846 = vmatpush2.msra.mxu0 0.0
    %847 = vmatprep.subr.mxu0 0.0
    %848 = vmatpush2.msra.mxu0 0.0
    %849 = vmatprep.subr.mxu0 0.0
    %850 = vmatpush2.msra.mxu0 0.0
    %851 = vmatprep.subr.mxu0 0.0
    %852 = vmatpush2.msra.mxu0 0.0
    %853 = vmatprep.subr.mxu0 0.0
    %854 = vmatpush2.msra.mxu0 0.0
    %855 = vmatprep.subr.mxu0 0.0
    %856 = vmatpush2.msra.mxu0 0.0
    %857 = vmatprep.subr.mxu0 0.0
    %858 = vmatpush2.msra.mxu0 0.0
    %859 = vmatprep.subr.mxu0 0.0
    %860 = vmatpush2.msra.mxu0 0.0
    %861 = vmatprep.subr.mxu0 0.0
    %862 = vmatpush2.msra.mxu0 0.0
    %863 = vmatprep.subr.mxu0 0.0
    %864 = vmatpush2.msra.mxu0 0.0
    %865 = vmatprep.subr.mxu0 0.0
    %866 = vmatpush2.msra.mxu0 0.0
    %867 = vmatprep.subr.mxu0 0.0
    %868 = vmatpush2.msra.mxu0 0.0
    %869 = vmatprep.subr.mxu0 0.0
    %870 = vmatpush2.msra.mxu0 0.0
    %871 = vmatprep.mubr.f32.mxu0 0.0
    %872 = vmatmul.mubr.f32.gmra.mxu0 %v802
    %v873 = vpop.f32.mrf.mxu0
    %v874 = vadd.f32 0.0, %v873
    %v875 = vpop.f32.mrf.mxu0
    %876 = vmatprep.mubr.f32.mxu0 0.0
    %877 = vmatmul.mubr.f32.gmra.mxu0 %v805
    %v878 = vpop.f32.mrf.mxu0
    %v879 = vadd.f32 0.0, %v878
    %v880 = vpop.f32.mrf.mxu0
    %881 = vdwg.mxu0
    %882 = vrot.lane.b32.xlu0 %v151, 60
    %v883 = vpop.permute.xlu0 %882
    %v885 = vsel %vm277, %v883, %v267
    %886 = vrot.lane.b32.xlu0 %v161, 112
    %v887 = vpop.permute.xlu0 %886
    %888 = vrot.lane.b32.xlu0 %v693, 112
    %v889 = vpop.permute.xlu0 %888
    %v890 = vsel %vm282, %v887, 0
    %v892 = vsel %vm282, %v889, 0
    %v895 = vsel %vm282, %v885, 0
    %897 = vmatprep.subr.mxu0 0.0
    %898 = vmatpush1.xpose.msra.mxu0 0.0
    %899 = vmatprep.subr.mxu0 0.0
    %900 = vmatpush1.xpose.msra.mxu0 0.0
    %901 = vmatprep.subr.mxu0 0.0
    %902 = vmatpush1.xpose.msra.mxu0 0.0
    %903 = vmatprep.subr.mxu0 0.0
    %904 = vmatpush1.xpose.msra.mxu0 0.0
    %905 = vmatprep.subr.mxu0 0.0
    %906 = vmatpush1.xpose.msra.mxu0 0.0
    %907 = vmatprep.subr.mxu0 0.0
    %908 = vmatpush1.xpose.msra.mxu0 0.0
    %909 = vmatprep.subr.mxu0 0.0
    %910 = vmatpush1.xpose.msra.mxu0 0.0
    %911 = vmatprep.subr.mxu0 0.0
    %912 = vmatpush1.xpose.msra.mxu0 0.0
    %913 = vmatprep.subr.mxu0 0.0
    %914 = vmatpush1.xpose.msra.mxu0 0.0
    %915 = vmatprep.subr.mxu0 0.0
    %916 = vmatpush1.xpose.msra.mxu0 0.0
    %917 = vmatprep.subr.mxu0 0.0
    %918 = vmatpush1.xpose.msra.mxu0 0.0
    %919 = vmatprep.subr.mxu0 0.0
    %920 = vmatpush1.xpose.msra.mxu0 0.0
    %921 = vmatprep.subr.mxu0 0.0
    %922 = vmatpush1.xpose.msra.mxu0 0.0
    %923 = vmatprep.subr.mxu0 0.0
    %924 = vmatpush1.xpose.msra.mxu0 0.0
    %925 = vmatprep.subr.mxu0 0.0
    %926 = vmatpush1.xpose.msra.mxu0 0.0
    %927 = vmatprep.subr.mxu0 0.0
    %928 = vmatpush1.xpose.msra.mxu0 %v895
    %929 = vmatprep.subr.mxu0 0.0
    %930 = vmatpush2.xpose.msra.mxu0 0.0
    %931 = vmatprep.subr.mxu0 0.0
    %932 = vmatpush2.xpose.msra.mxu0 0.0
    %933 = vmatprep.subr.mxu0 0.0
    %934 = vmatpush2.xpose.msra.mxu0 0.0
    %935 = vmatprep.subr.mxu0 0.0
    %936 = vmatpush2.xpose.msra.mxu0 0.0
    %937 = vmatprep.subr.mxu0 0.0
    %938 = vmatpush2.xpose.msra.mxu0 0.0
    %939 = vmatprep.subr.mxu0 0.0
    %940 = vmatpush2.xpose.msra.mxu0 0.0
    %941 = vmatprep.subr.mxu0 0.0
    %942 = vmatpush2.xpose.msra.mxu0 0.0
    %943 = vmatprep.subr.mxu0 0.0
    %944 = vmatpush2.xpose.msra.mxu0 0.0
    %945 = vmatprep.subr.mxu0 0.0
    %946 = vmatpush2.xpose.msra.mxu0 0.0
    %947 = vmatprep.subr.mxu0 0.0
    %948 = vmatpush2.xpose.msra.mxu0 0.0
    %949 = vmatprep.subr.mxu0 0.0
    %950 = vmatpush2.xpose.msra.mxu0 0.0
    %951 = vmatprep.subr.mxu0 0.0
    %952 = vmatpush2.xpose.msra.mxu0 0.0
    %953 = vmatprep.subr.mxu0 0.0
    %954 = vmatpush2.xpose.msra.mxu0 0.0
    %955 = vmatprep.subr.mxu0 0.0
    %956 = vmatpush2.xpose.msra.mxu0 0.0
    %957 = vmatprep.subr.mxu0 0.0
    %958 = vmatpush2.xpose.msra.mxu0 0.0
    %959 = vmatprep.subr.mxu0 0.0
    %960 = vmatpush2.xpose.msra.mxu0 0.0
    %961 = vmatprep.mubr.f32.mxu0 0.0
    %962 = vmatmul.mubr.f32.gmra.mxu0 %v890
    %v963 = vpop.f32.mrf.mxu0
    %v964 = vadd.f32 0.0, %v963
    %v965 = vpop.f32.mrf.mxu0
    %966 = vmatprep.mubr.f32.mxu0 0.0
    %967 = vmatmul.mubr.f32.gmra.mxu0 %v892
    %v968 = vpop.f32.mrf.mxu0
    %v969 = vadd.f32 0.0, %v968
    %v970 = vpop.f32.mrf.mxu0
    %971 = vdwg.mxu0
    %v972 = vsel %vm282, %v964, -inf
    %973 = vmax.xlane.f32.xlu0 %v972
    %v974 = vpop.xlane.xlu0 %973
    %v975 = vsel %vm282, %v969, -inf
    %976 = vmax.xlane.f32.xlu0 %v975
    %v977 = vpop.xlane.xlu0 %976
    %v978 = vsub.f32 %v964, %v974
    %v979 = vsub.f32 %v969, %v977
    %v980 = vmul.f32 %v978, 1.442695
    %v981 = vpow.pop %v980
    %v982 = vmul.f32 %v979, 1.442695
    %v983 = vpow.pop %v982
    %v984 = vsel %vm282, %v981, 0.0
    %985 = vadd.xlane.f32.xlu0 %v984
    %v986 = vpop.xlane.xlu0 %985
    %v987 = vsel %vm282, %v983, 0.0
    %988 = vadd.xlane.f32.xlu0 %v987
    %v989 = vpop.xlane.xlu0 %988
    %v990 = vrcp.pop %v986
    %v991 = vrcp.pop %v989
    %v992 = vmul.f32 %v981, %v990
    %v993 = vmul.f32 %v983, %v991
    %994 = vrot.lane.b32.xlu0 %v267, 112
    %v995 = vpop.permute.xlu0 %994
    %v998 = vsel %vm282, %v992, 0
    %v1001 = vsel %vm282, %v993, 0
    %1003 = vmatprep.subr.mxu0 0.0
    %1004 = vmatpush1.msra.mxu0 0.0
    %1005 = vmatprep.subr.mxu0 0.0
    %1006 = vmatpush1.msra.mxu0 0.0
    %1007 = vmatprep.subr.mxu0 0.0
    %1008 = vmatpush1.msra.mxu0 0.0
    %1009 = vmatprep.subr.mxu0 0.0
    %1010 = vmatpush1.msra.mxu0 0.0
    %1011 = vmatprep.subr.mxu0 0.0
    %1012 = vmatpush1.msra.mxu0 0.0
    %1013 = vmatprep.subr.mxu0 0.0
    %1014 = vmatpush1.msra.mxu0 0.0
    %1015 = vmatprep.subr.mxu0 0.0
    %1016 = vmatpush1.msra.mxu0 0.0
    %1017 = vmatprep.subr.mxu0 0.0
    %1018 = vmatpush1.msra.mxu0 0.0
    %1019 = vmatprep.subr.mxu0 0.0
    %1020 = vmatpush1.msra.mxu0 0.0
    %1021 = vmatprep.subr.mxu0 0.0
    %1022 = vmatpush1.msra.mxu0 0.0
    %1023 = vmatprep.subr.mxu0 0.0
    %1024 = vmatpush1.msra.mxu0 0.0
    %1025 = vmatprep.subr.mxu0 0.0
    %1026 = vmatpush1.msra.mxu0 0.0
    %1027 = vmatprep.subr.mxu0 0.0
    %1028 = vmatpush1.msra.mxu0 0.0
    %1029 = vmatprep.subr.mxu0 0.0
    %1030 = vmatpush1.msra.mxu0 0.0
    %1031 = vmatprep.subr.mxu0 0.0
    %1032 = vmatpush1.msra.mxu0 0.0
    %1033 = vmatprep.subr.mxu0 0.0
    %1034 = vmatpush1.msra.mxu0 %v995
    %1035 = vmatprep.subr.mxu0 0.0
    %1036 = vmatpush2.msra.mxu0 0.0
    %1037 = vmatprep.subr.mxu0 0.0
    %1038 = vmatpush2.msra.mxu0 0.0
    %1039 = vmatprep.subr.mxu0 0.0
    %1040 = vmatpush2.msra.mxu0 0.0
    %1041 = vmatprep.subr.mxu0 0.0
    %1042 = vmatpush2.msra.mxu0 0.0
    %1043 = vmatprep.subr.mxu0 0.0
    %1044 = vmatpush2.msra.mxu0 0.0
    %1045 = vmatprep.subr.mxu0 0.0
    %1046 = vmatpush2.msra.mxu0 0.0
    %1047 = vmatprep.subr.mxu0 0.0
    %1048 = vmatpush2.msra.mxu0 0.0
    %1049 = vmatprep.subr.mxu0 0.0
    %1050 = vmatpush2.msra.mxu0 0.0
    %1051 = vmatprep.subr.mxu0 0.0
    %1052 = vmatpush2.msra.mxu0 0.0
    %1053 = vmatprep.subr.mxu0 0.0
    %1054 = vmatpush2.msra.mxu0 0.0
    %1055 = vmatprep.subr.mxu0 0.0
    %1056 = vmatpush2.msra.mxu0 0.0
    %1057 = vmatprep.subr.mxu0 0.0
    %1058 = vmatpush2.msra.mxu0 0.0
    %1059 = vmatprep.subr.mxu0 0.0
    %1060 = vmatpush2.msra.mxu0 0.0
    %1061 = vmatprep.subr.mxu0 0.0
    %1062 = vmatpush2.msra.mxu0 0.0
    %1063 = vmatprep.subr.mxu0 0.0
    %1064 = vmatpush2.msra.mxu0 0.0
    %1065 = vmatprep.subr.mxu0 0.0
    %1066 = vmatpush2.msra.mxu0 0.0
    %1067 = vmatprep.mubr.f32.mxu0 0.0
    %1068 = vmatmul.mubr.f32.gmra.mxu0 %v998
    %v1069 = vpop.f32.mrf.mxu0
    %v1070 = vadd.f32 0.0, %v1069
    %v1071 = vpop.f32.mrf.mxu0
    %1072 = vmatprep.mubr.f32.mxu0 0.0
    %1073 = vmatmul.mubr.f32.gmra.mxu0 %v1001
    %v1074 = vpop.f32.mrf.mxu0
    %v1075 = vadd.f32 0.0, %v1074
    %v1076 = vpop.f32.mrf.mxu0
    %1077 = vdwg.mxu0
    %1079 = vrot.lane.b32.xlu0 %v879, 8
    %v1080 = vpop.permute.xlu0 %1079
    %1083 = vrot.lane.b32.xlu0 %v1070, 16
    %v1084 = vpop.permute.xlu0 %1083
    %1087 = vrot.lane.b32.xlu0 %v1075, 24
    %v1088 = vpop.permute.xlu0 %1087
    %v1090 = vsel %vm282, %v874, %v1080
    %v1091 = vsel %vm190, %v1090, %v1084
    %v1092 = vsel %vm681, %v1091, %v1088
    %1099 = vrot.lane.b32.xlu0 %v58, 16
    %v1100 = vpop.permute.xlu0 %1099
    %1101 = vrot.lane.b32.xlu0 %v59, 16
    %v1102 = vpop.permute.xlu0 %1101
    %1103 = vrot.lane.b32.xlu0 %v60, 16
    %v1104 = vpop.permute.xlu0 %1103
    %1105 = vrot.lane.b32.xlu0 %v61, 16
    %v1106 = vpop.permute.xlu0 %1105
    %1107 = vrot.lane.b32.xlu0 %v62, 16
    %v1108 = vpop.permute.xlu0 %1107
    %1109 = vrot.lane.b32.xlu0 %v63, 16
    %v1110 = vpop.permute.xlu0 %1109
    %1111 = vrot.lane.b32.xlu0 %v64, 16
    %v1112 = vpop.permute.xlu0 %1111
    %1113 = vrot.lane.b32.xlu0 %v65, 16
    %v1114 = vpop.permute.xlu0 %1113
    %v1115 = vsel %vm190, %v1100, %v1102
    %v1116 = vsel %vm190, %v1104, %v1106
    %v1117 = vsel %vm190, %v1108, %v1110
    %v1118 = vsel %vm190, %v1112, %v1114
    %v1124 = vsel %vm68, %v682, 0
    %v1127 = vsel %vm68, %v1092, 0
    %1129 = vmatprep.subr.mxu0 0.0
    %1130 = vmatpush1.msra.mxu0 0.0
    %1131 = vmatprep.subr.mxu0 0.0
    %1132 = vmatpush1.msra.mxu0 0.0
    %1133 = vmatprep.subr.mxu0 0.0
    %1134 = vmatpush1.msra.mxu0 0.0
    %1135 = vmatprep.subr.mxu0 0.0
    %1136 = vmatpush1.msra.mxu0 0.0
    %1137 = vmatprep.subr.mxu0 0.0
    %1138 = vmatpush1.msra.mxu0 0.0
    %1139 = vmatprep.subr.mxu0 0.0
    %1140 = vmatpush1.msra.mxu0 0.0
    %1141 = vmatprep.subr.mxu0 0.0
    %1142 = vmatpush1.msra.mxu0 0.0
    %1143 = vmatprep.subr.mxu0 0.0
    %1144 = vmatpush1.msra.mxu0 0.0
    %1145 = vmatprep.subr.mxu0 0.0
    %1146 = vmatpush1.msra.mxu0 0.0
    %1147 = vmatprep.subr.mxu0 0.0
    %1148 = vmatpush1.msra.mxu0 0.0
    %1149 = vmatprep.subr.mxu0 0.0
    %1150 = vmatpush1.msra.mxu0 0.0
    %1151 = vmatprep.subr.mxu0 0.0
    %1152 = vmatpush1.msra.mxu0 0.0
    %1153 = vmatprep.subr.mxu0 0.0
    %1154 = vmatpush1.msra.mxu0 %v1118
    %1155 = vmatprep.subr.mxu0 0.0
    %1156 = vmatpush1.msra.mxu0 %v1117
    %1157 = vmatprep.subr.mxu0 0.0
    %1158 = vmatpush1.msra.mxu0 %v1116
    %1159 = vmatprep.subr.mxu0 0.0
    %1160 = vmatpush1.msra.mxu0 %v1115
    %1161 = vmatprep.subr.mxu0 0.0
    %1162 = vmatpush2.msra.mxu0 0.0
    %1163 = vmatprep.subr.mxu0 0.0
    %1164 = vmatpush2.msra.mxu0 0.0
    %1165 = vmatprep.subr.mxu0 0.0
    %1166 = vmatpush2.msra.mxu0 0.0
    %1167 = vmatprep.subr.mxu0 0.0
    %1168 = vmatpush2.msra.mxu0 0.0
    %1169 = vmatprep.subr.mxu0 0.0
    %1170 = vmatpush2.msra.mxu0 0.0
    %1171 = vmatprep.subr.mxu0 0.0
    %1172 = vmatpush2.msra.mxu0 0.0
    %1173 = vmatprep.subr.mxu0 0.0
    %1174 = vmatpush2.msra.mxu0 0.0
    %1175 = vmatprep.subr.mxu0 0.0
    %1176 = vmatpush2.msra.mxu0 0.0
    %1177 = vmatprep.subr.mxu0 0.0
    %1178 = vmatpush2.msra.mxu0 0.0
    %1179 = vmatprep.subr.mxu0 0.0
    %1180 = vmatpush2.msra.mxu0 0.0
    %1181 = vmatprep.subr.mxu0 0.0
    %1182 = vmatpush2.msra.mxu0 0.0
    %1183 = vmatprep.subr.mxu0 0.0
    %1184 = vmatpush2.msra.mxu0 0.0
    %1185 = vmatprep.subr.mxu0 0.0
    %1186 = vmatpush2.msra.mxu0 0.0
    %1187 = vmatprep.subr.mxu0 0.0
    %1188 = vmatpush2.msra.mxu0 0.0
    %1189 = vmatprep.subr.mxu0 0.0
    %1190 = vmatpush2.msra.mxu0 0.0
    %1191 = vmatprep.subr.mxu0 0.0
    %1192 = vmatpush2.msra.mxu0 0.0
    %1193 = vmatprep.mubr.f32.mxu0 0.0
    %1194 = vmatmul.mubr.f32.gmra.mxu0 %v1124
    %v1195 = vpop.f32.mrf.mxu0
    %v1196 = vadd.f32 0.0, %v1195
    %v1197 = vpop.f32.mrf.mxu0
    %1198 = vmatprep.mubr.f32.mxu0 0.0
    %1199 = vmatmul.mubr.f32.gmra.mxu0 %v1127
    %v1200 = vpop.f32.mrf.mxu0
    %v1201 = vadd.f32 0.0, %v1200
    %v1202 = vpop.f32.mrf.mxu0
    %1203 = vdwg.mxu0
    %1204 = vst.msk [vmem:[#allocation8] sm:$0xff] %vm68, %v1196
    %s1205 = scalar_lea.vmem [#allocation8], 8
    %1206 = vst.msk [vmem:[%s1205] sm:$0xff] %vm68, %v1201
    // Predicated region
    $region26: #{fused_forward.1} parent=1 // pred_check
      _
    $region27: #{fused_forward.1} parent=1 // pred_check_branch
      %1208 = sbr.rel (0) target = $region29
    $region28: #{fused_forward.1} parent=1 // pred_region
      %s1210 = ssub.s32 256, 256
      %1211 = vsyncadd [#allocation4], %s1210
      %s1212 = sshll.u32 [#allocation8], 4
      %s1213 = int_to_ptr.vmem [resolvable:$true] %s1212
      %1218 = dma.vmem_to_hbm [thread:$0]  %s1213, 256, %s3, [#allocation4], 128, 128, 8
    $region29: #{fused_forward.1} parent=1 // pred_fallthru
      _
    // Predicated region
    $region30: #{fused_forward.1} parent=1 // pred_check
      _
    $region31: #{fused_forward.1} parent=1 // pred_check_branch
      %1220 = sbr.rel (0) target = $region33
    $region32: #{fused_forward.1} parent=1 // pred_region
      %1221 = dma.done [#allocation4], 256
    $region33: #{fused_forward.1} parent=1 // pred_fallthru
      _
    %1222 = vsyncpa [#allocation3], 1
    %1223 = vsyncpa [#allocation6], 1
    %1224 = vsyncpa [#allocation4], 1

</llo_original>
